<compile_context>
chip_gen: v6e
topology: v6e:2x2x1
jax: 0.10.0
libtpu: 0.0.40
codegen_flags: <defaults>
</compile_context>

<pallas_src>
import functools
import math

import jax
import jax.numpy as jnp
from jax import lax
from jax.experimental import pallas as pl
from jax.experimental.pallas import tpu as pltpu  # noqa: F401  (kept for TPU builds)


def _fused_kernel(x_ref, g_ref, enc_w_ref, enc_b_ref, w1_ref, b1_ref,
                  w2_ref, b2_ref, dec_w_ref, dec_b_ref, out_ref, kl_ref):
    f32 = jnp.float32
    T = x_ref.shape[1]                    # time steps per batch element
    BT, k = g_ref.shape                   # B*T rows, k categories
    hid = w1_ref.shape[0]
    B = BT // T
    r = hid // T                          # regroup factor of the torch .view()

    # ---------------- constants (built once: single invocation, no grid) ----------
    # time-shift matrices for the k=3, pad=1 convs: x @ s_prev -> x[:, t-1] (0 at t=0)
    rt = lax.broadcasted_iota(jnp.int32, (T, T), 0)
    ct = lax.broadcasted_iota(jnp.int32, (T, T), 1)
    s_prev = (rt == ct - 1).astype(f32)
    s_next = (rt == ct + 1).astype(f32)

    def conv1d_k3(inp, w_bd, bias):
        # inp: (B*Cin, T); w_bd: (B*Cout, 3*B*Cin) block-diag over batch; bias: (B*Cout, 1)
        x_m1 = jnp.dot(inp, s_prev, preferred_element_type=f32)
        x_p1 = jnp.dot(inp, s_next, preferred_element_type=f32)
        x_cat = jnp.concatenate([x_m1, inp, x_p1], axis=0)        # (3*B*Cin, T)
        return jnp.dot(w_bd, x_cat, preferred_element_type=f32) + bias

    # ---------------- encoder: Conv1d(c_in -> hid, k=3, pad=1) + ReLU -------------
    x = x_ref[...].astype(f32)                                    # (B*c_in, T)
    lat = jnp.maximum(conv1d_k3(x, enc_w_ref[...], enc_b_ref[...]), 0.0)  # (B*hid, T)

    # ---------------- torch `.view(B*T, hid)`:  flat[n, q*T + t] = lat[r*n + q, t] --
    # expressed as a sum of r constant selection matmuls (MXU only, no reshapes)
    rn = lax.broadcasted_iota(jnp.int32, (BT, B * hid), 0)
    cn = lax.broadcasted_iota(jnp.int32, (BT, B * hid), 1)
    re_ = lax.broadcasted_iota(jnp.int32, (T, hid), 0)
    ce_ = lax.broadcasted_iota(jnp.int32, (T, hid), 1)
    flat = None
    for q in range(r):
        p_q = (cn == r * rn + q).astype(f32)          # (BT, B*hid)  row selection
        e_q = (ce_ == q * T + re_).astype(f32)        # (T, hid)     column placement
        term = jnp.dot(jnp.dot(p_q, lat, preferred_element_type=f32),
                       e_q, preferred_element_type=f32)
        flat = term if flat is None else flat + term  # (BT, hid)

    # ---------------- bottleneck: lin1 -> softmax / KL -> hard gumbel -> lin2 ------
    logits = jnp.dot(flat, w1_ref[...], preferred_element_type=f32) + b1_ref[...]  # (BT, k)

    m = jnp.max(logits, axis=-1, keepdims=True)
    e = jnp.exp(logits - m)
    q_y = e / jnp.sum(e, axis=-1, keepdims=True)
    log_q = jnp.log(q_y + 1e-20)

    kl_terms = q_y * (log_q - math.log(1.0 / k))
    row_kl = jnp.sum(kl_terms, axis=-1, keepdims=True)            # (BT, 1)
    kl_ref[...] = jnp.sum(row_kl, axis=0, keepdims=True) * (1.0 / BT)   # (1, 1)

    # hard gumbel-softmax forward value = one_hot(argmax(logits + g)); the /tau
    # rescale cannot change the argmax, so it is dropped (dead VPU work).
    pert = logits + g_ref[...]
    mx = jnp.max(pert, axis=-1, keepdims=True)
    ik = lax.broadcasted_iota(jnp.int32, (BT, k), 1).astype(f32)
    first = jnp.min(jnp.where(pert >= mx, ik, float(k)), axis=-1, keepdims=True)
    y = (ik == first).astype(f32)                                 # (BT, k) one-hot

    flat_new = jnp.dot(y, w2_ref[...], preferred_element_type=f32) + b2_ref[...]   # (BT, hid)

    # ---------------- torch `.view(B, hid, T)` back: new_lat[r*n+q, t] = flat_new[n, q*T+t]
    rm = lax.broadcasted_iota(jnp.int32, (B * hid, BT), 0)
    cm = lax.broadcasted_iota(jnp.int32, (B * hid, BT), 1)
    rj = lax.broadcasted_iota(jnp.int32, (hid, T), 0)
    cj = lax.broadcasted_iota(jnp.int32, (hid, T), 1)
    new_lat = None
    for q in range(r):
        pt_q = (rm == r * cm + q).astype(f32)         # (B*hid, BT)
        et_q = (rj == q * T + cj).astype(f32)         # (hid, T)
        term = jnp.dot(jnp.dot(pt_q, flat_new, preferred_element_type=f32),
                       et_q, preferred_element_type=f32)
        new_lat = term if new_lat is None else new_lat + term     # (B*hid, T)

    # ---------------- decoder: Conv1d(hid -> c_in, k=3, pad=1) ---------------------
    out = conv1d_k3(new_lat, dec_w_ref[...], dec_b_ref[...])      # (B*c_in, T)
    out_ref[...] = out.astype(out_ref.dtype)


def model_forward(x, params, rng, *, tau=1.0):
    """Fused forward pass. x: (B, c_in, T) NCW, params in torch layouts.

    `tau` is accepted for API parity but has no effect on the hard forward
    sample (argmax is invariant to a positive rescale) nor on the KL term.
    """
    del tau
    B, c_in, T = x.shape
    k, hid = params["lin1_w"].shape
    assert params["lin2_w"].shape == (hid, k)
    assert params["enc_w"].shape == (hid, c_in, 3)
    assert params["dec_w"].shape == (c_in, hid, 3)
    assert hid % T == 0, "kernel regroup currently requires hid % T == 0"

    f32 = jnp.float32
    BT = B * T

    # ---- wrapper-side layout plumbing (free XLA ops) ----
    x_tall = x.reshape(B * c_in, T).astype(f32)       # row-major: batches stacked in rows

    # gumbel noise drawn once for all B*T rows (torch uses torch.rand; stream differs)
    u = jax.random.uniform(rng, (BT, k), dtype=f32)
    g = -jnp.log(-jnp.log(u + 1e-20) + 1e-20)

    def conv_blockdiag(w, b):
        # torch Conv1d weight (Cout, Cin, 3) -> block-diag (B*Cout, 3*B*Cin) acting on
        # the batch-stacked "tall" layout, plus a tall bias column.
        w_bd = jnp.concatenate(
            [jnp.kron(jnp.eye(B, dtype=f32), w[:, :, s].astype(f32)) for s in range(3)],
            axis=1)
        b_tall = jnp.tile(b.astype(f32).reshape(-1, 1), (B, 1))
        return w_bd, b_tall

    enc_w_bd, enc_b_tall = conv_blockdiag(params["enc_w"], params["enc_b"])
    dec_w_bd, dec_b_tall = conv_blockdiag(params["dec_w"], params["dec_b"])

    w1t = params["lin1_w"].astype(f32).T              # (hid, k)
    b1 = params["lin1_b"].astype(f32).reshape(1, k)
    w2t = params["lin2_w"].astype(f32).T              # (k, hid)
    b2 = params["lin2_b"].astype(f32).reshape(1, hid)

    out_tall, kl2d = pl.pallas_call(
        _fused_kernel,
        out_shape=(jax.ShapeDtypeStruct((B * c_in, T), f32),   # row-major torch output
                   jax.ShapeDtypeStruct((1, 1), f32)),         # scalar KL
    )(x_tall, g, enc_w_bd, enc_b_tall, w1t, b1, w2t, b2, dec_w_bd, dec_b_tall)

    return out_tall.reshape(B, c_in, T), kl2d[0, 0]


def _reference_forward(x, params, g, k):
    """Pure-JAX mirror of the torch Model.forward (same gumbel noise g)."""
    B, c_in, T = x.shape
    hid = params["lin2_w"].shape[0]

    def conv1d(xx, w, b):   # xx (B, Cin, T), w (Cout, Cin, 3), b (Cout,)
        xp = jnp.pad(xx, ((0, 0), (0, 0), (1, 1)))
        out = (jnp.einsum('oi,bit->bot', w[:, :, 0], xp[:, :, 0:T]) +
               jnp.einsum('oi,bit->bot', w[:, :, 1], xp[:, :, 1:T + 1]) +
               jnp.einsum('oi,bit->bot', w[:, :, 2], xp[:, :, 2:T + 2]))
        return out + b.reshape(1, -1, 1)

    lat = jnp.maximum(conv1d(x, params["enc_w"], params["enc_b"]), 0.0)   # (B, hid, T)
    flat = lat.reshape(B * T, hid)                                        # torch .view
    logits = flat @ params["lin1_w"].T + params["lin1_b"]
    q_y = jax.nn.softmax(logits, axis=-1)
    log_q = jnp.log(q_y + 1e-20)
    kl = jnp.mean(jnp.sum(q_y * (log_q - jnp.log(1.0 / k)), axis=1))
    y = jax.nn.one_hot(jnp.argmax(logits + g, axis=-1), k, dtype=jnp.float32)
    flat_new = y @ params["lin2_w"].T + params["lin2_b"]
    new_lat = flat_new.reshape(B, hid, T)                                 # torch .view
    out = conv1d(new_lat, params["dec_w"], params["dec_b"])
    return out, kl


if __name__ == "__main__":
    B, c_in, T, hid, k, tau = 2, 8, 16, 32, 128, 1.0

    key = jax.random.PRNGKey(0)
    kx, kn, ke_w, ke_b, k1w, k1b, k2w, k2b, kd_w, kd_b = jax.random.split(key, 10)

    params = {
        "enc_w": 0.1 * jax.random.normal(ke_w, (hid, c_in, 3), jnp.float32),
        "enc_b": 0.1 * jax.random.normal(ke_b, (hid,), jnp.float32),
        "lin1_w": 0.1 * jax.random.normal(k1w, (k, hid), jnp.float32),
        "lin1_b": 0.1 * jax.random.normal(k1b, (k,), jnp.float32),
        "lin2_w": 0.1 * jax.random.normal(k2w, (hid, k), jnp.float32),
        "lin2_b": 0.1 * jax.random.normal(k2b, (hid,), jnp.float32),
        "dec_w": 0.1 * jax.random.normal(kd_w, (c_in, hid, 3), jnp.float32),
        "dec_b": 0.1 * jax.random.normal(kd_b, (c_in,), jnp.float32),
    }
    x = jax.random.normal(kx, (B, c_in, T), dtype=jnp.float32)

    fwd = jax.jit(functools.partial(model_forward, tau=tau))
    out, kl = fwd(x, params, kn)
    jax.block_until_ready((out, kl))

    assert out.shape == (B, c_in, T) and kl.shape == ()
    assert bool(jnp.isfinite(kl)) and bool(jnp.all(jnp.isfinite(out)))

    # correctness check against a pure-JAX mirror of the torch forward (same noise)
    u = jax.random.uniform(kn, (B * T, k), dtype=jnp.float32)
    g = -jnp.log(-jnp.log(u + 1e-20) + 1e-20)
    out_ref, kl_ref = _reference_forward(x, params, g, k)
    assert bool(jnp.allclose(out, out_ref, atol=1e-3, rtol=1e-3))
    assert bool(jnp.allclose(kl, kl_ref, atol=1e-3, rtol=1e-3))

    print("KERNEL_OK")
</pallas_src>

<mosaic_0001>
module attributes {stable_mosaic.version = 11 : i64} {
  func.func @_fused_kernel(%arg0: memref<16x16xf32, #tpu.memory_space<vmem>>, %arg1: memref<32x128xf32, #tpu.memory_space<vmem>>, %arg2: memref<64x48xf32, #tpu.memory_space<vmem>>, %arg3: memref<64x1xf32, #tpu.memory_space<vmem>>, %arg4: memref<32x128xf32, #tpu.memory_space<vmem>>, %arg5: memref<1x128xf32, #tpu.memory_space<vmem>>, %arg6: memref<128x32xf32, #tpu.memory_space<vmem>>, %arg7: memref<1x32xf32, #tpu.memory_space<vmem>>, %arg8: memref<16x192xf32, #tpu.memory_space<vmem>>, %arg9: memref<16x1xf32, #tpu.memory_space<vmem>>, %arg10: memref<16x16xf32, #tpu.memory_space<vmem>>, %arg11: memref<1x1xf32, #tpu.memory_space<vmem>>) attributes {dimension_semantics = [], scalar_prefetch = 0 : i64, scratch_operands = 0 : i64, tpu.core_type = #tpu.core_type<tc>} {
    %0 = tpu.iota {dimensions = array<i32: 0>} : vector<16x16xi32>
    %1 = tpu.iota {dimensions = array<i32: 1>} : vector<16x16xi32>
    %c1_i32 = arith.constant 1 : i32
    %2 = vector.broadcast %c1_i32 : i32 to vector<16x16xi32>
    %3 = arith.subi %1, %2 : vector<16x16xi32>
    %4 = arith.cmpi eq, %0, %3 : vector<16x16xi32>
    %5 = arith.extui %4 : vector<16x16xi1> to vector<16x16xi32>
    %6 = arith.sitofp %5 : vector<16x16xi32> to vector<16x16xf32>
    %c1_i32_0 = arith.constant 1 : i32
    %7 = vector.broadcast %c1_i32_0 : i32 to vector<16x16xi32>
    %8 = arith.addi %1, %7 : vector<16x16xi32>
    %9 = arith.cmpi eq, %0, %8 : vector<16x16xi32>
    %10 = arith.extui %9 : vector<16x16xi1> to vector<16x16xi32>
    %11 = arith.sitofp %10 : vector<16x16xi32> to vector<16x16xf32>
    %c0 = arith.constant 0 : index
    %c0_1 = arith.constant 0 : index
    %12 = vector.load %arg0[%c0, %c0_1] : memref<16x16xf32, #tpu.memory_space<vmem>>, vector<16x16xf32>
    %c0_2 = arith.constant 0 : index
    %c0_3 = arith.constant 0 : index
    %13 = vector.load %arg2[%c0_2, %c0_3] : memref<64x48xf32, #tpu.memory_space<vmem>>, vector<64x48xf32>
    %c0_4 = arith.constant 0 : index
    %c0_5 = arith.constant 0 : index
    %14 = vector.load %arg3[%c0_4, %c0_5] : memref<64x1xf32, #tpu.memory_space<vmem>>, vector<64x1xf32>
    %cst = arith.constant dense<0.000000e+00> : vector<16x16xf32>
    %15 = tpu.matmul %12, %6, %cst {dimension_numbers = #tpu.dot_dimension_numbers<[1], [0], [0], [1], [0, 0, 1, 1], [], []>} : vector<16x16xf32>, vector<16x16xf32>, vector<16x16xf32> -> vector<16x16xf32>
    %cst_6 = arith.constant dense<0.000000e+00> : vector<16x16xf32>
    %16 = tpu.matmul %12, %11, %cst_6 {dimension_numbers = #tpu.dot_dimension_numbers<[1], [0], [0], [1], [0, 0, 1, 1], [], []>} : vector<16x16xf32>, vector<16x16xf32>, vector<16x16xf32> -> vector<16x16xf32>
    %17 = tpu.concatenate %15, %12, %16 in 0 : vector<16x16xf32>, vector<16x16xf32>, vector<16x16xf32> -> vector<48x16xf32>
    %cst_7 = arith.constant dense<0.000000e+00> : vector<64x16xf32>
    %18 = tpu.matmul %13, %17, %cst_7 {dimension_numbers = #tpu.dot_dimension_numbers<[1], [0], [0], [1], [0, 0, 1, 1], [], []>} : vector<64x48xf32>, vector<48x16xf32>, vector<64x16xf32> -> vector<64x16xf32>
    %19 = vector.broadcast %14 : vector<64x1xf32> to vector<64x16xf32>
    %20 = arith.addf %18, %19 : vector<64x16xf32>
    %cst_8 = arith.constant 0.000000e+00 : f32
    %21 = vector.broadcast %cst_8 : f32 to vector<64x16xf32>
    %22 = arith.maximumf %20, %21 : vector<64x16xf32>
    %23 = tpu.iota {dimensions = array<i32: 0>} : vector<32x64xi32>
    %24 = tpu.iota {dimensions = array<i32: 1>} : vector<32x64xi32>
    %25 = tpu.iota {dimensions = array<i32: 0>} : vector<16x32xi32>
    %26 = tpu.iota {dimensions = array<i32: 1>} : vector<16x32xi32>
    %c2_i32 = arith.constant 2 : i32
    %27 = vector.broadcast %c2_i32 : i32 to vector<32x64xi32>
    %28 = arith.muli %27, %23 : vector<32x64xi32>
    %c0_i32 = arith.constant 0 : i32
    %29 = vector.broadcast %c0_i32 : i32 to vector<32x64xi32>
    %30 = arith.addi %28, %29 : vector<32x64xi32>
    %31 = arith.cmpi eq, %24, %30 : vector<32x64xi32>
    %32 = arith.extui %31 : vector<32x64xi1> to vector<32x64xi32>
    %33 = arith.sitofp %32 : vector<32x64xi32> to vector<32x64xf32>
    %c0_i32_9 = arith.constant 0 : i32
    %34 = vector.broadcast %c0_i32_9 : i32 to vector<16x32xi32>
    %35 = arith.addi %34, %25 : vector<16x32xi32>
    %36 = arith.cmpi eq, %26, %35 : vector<16x32xi32>
    %37 = arith.extui %36 : vector<16x32xi1> to vector<16x32xi32>
    %38 = arith.sitofp %37 : vector<16x32xi32> to vector<16x32xf32>
    %cst_10 = arith.constant dense<0.000000e+00> : vector<32x16xf32>
    %39 = tpu.matmul %33, %22, %cst_10 {dimension_numbers = #tpu.dot_dimension_numbers<[1], [0], [0], [1], [0, 0, 1, 1], [], []>} : vector<32x64xf32>, vector<64x16xf32>, vector<32x16xf32> -> vector<32x16xf32>
    %cst_11 = arith.constant dense<0.000000e+00> : vector<32x32xf32>
    %40 = tpu.matmul %39, %38, %cst_11 {dimension_numbers = #tpu.dot_dimension_numbers<[1], [0], [0], [1], [0, 0, 1, 1], [], []>} : vector<32x16xf32>, vector<16x32xf32>, vector<32x32xf32> -> vector<32x32xf32>
    %c2_i32_12 = arith.constant 2 : i32
    %41 = vector.broadcast %c2_i32_12 : i32 to vector<32x64xi32>
    %42 = arith.muli %41, %23 : vector<32x64xi32>
    %c1_i32_13 = arith.constant 1 : i32
    %43 = vector.broadcast %c1_i32_13 : i32 to vector<32x64xi32>
    %44 = arith.addi %42, %43 : vector<32x64xi32>
    %45 = arith.cmpi eq, %24, %44 : vector<32x64xi32>
    %46 = arith.extui %45 : vector<32x64xi1> to vector<32x64xi32>
    %47 = arith.sitofp %46 : vector<32x64xi32> to vector<32x64xf32>
    %c16_i32 = arith.constant 16 : i32
    %48 = vector.broadcast %c16_i32 : i32 to vector<16x32xi32>
    %49 = arith.addi %48, %25 : vector<16x32xi32>
    %50 = arith.cmpi eq, %26, %49 : vector<16x32xi32>
    %51 = arith.extui %50 : vector<16x32xi1> to vector<16x32xi32>
    %52 = arith.sitofp %51 : vector<16x32xi32> to vector<16x32xf32>
    %cst_14 = arith.constant dense<0.000000e+00> : vector<32x16xf32>
    %53 = tpu.matmul %47, %22, %cst_14 {dimension_numbers = #tpu.dot_dimension_numbers<[1], [0], [0], [1], [0, 0, 1, 1], [], []>} : vector<32x64xf32>, vector<64x16xf32>, vector<32x16xf32> -> vector<32x16xf32>
    %cst_15 = arith.constant dense<0.000000e+00> : vector<32x32xf32>
    %54 = tpu.matmul %53, %52, %cst_15 {dimension_numbers = #tpu.dot_dimension_numbers<[1], [0], [0], [1], [0, 0, 1, 1], [], []>} : vector<32x16xf32>, vector<16x32xf32>, vector<32x32xf32> -> vector<32x32xf32>
    %55 = arith.addf %40, %54 : vector<32x32xf32>
    %c0_16 = arith.constant 0 : index
    %c0_17 = arith.constant 0 : index
    %56 = vector.load %arg4[%c0_16, %c0_17] : memref<32x128xf32, #tpu.memory_space<vmem>>, vector<32x128xf32>
    %cst_18 = arith.constant dense<0.000000e+00> : vector<32x128xf32>
    %57 = tpu.matmul %55, %56, %cst_18 {dimension_numbers = #tpu.dot_dimension_numbers<[1], [0], [0], [1], [0, 0, 1, 1], [], []>} : vector<32x32xf32>, vector<32x128xf32>, vector<32x128xf32> -> vector<32x128xf32>
    %c0_19 = arith.constant 0 : index
    %c0_20 = arith.constant 0 : index
    %58 = vector.load %arg5[%c0_19, %c0_20] : memref<1x128xf32, #tpu.memory_space<vmem>>, vector<1x128xf32>
    %59 = vector.broadcast %58 : vector<1x128xf32> to vector<32x128xf32>
    %60 = arith.addf %57, %59 : vector<32x128xf32>
    %cst_21 = arith.constant dense<0xFF800000> : vector<32xf32>
    %61 = vector.multi_reduction <maximumf>, %60, %cst_21 [1] : vector<32x128xf32> to vector<32xf32>
    %62 = vector.shape_cast %61 : vector<32xf32> to vector<32x1xf32>
    %63 = vector.broadcast %62 : vector<32x1xf32> to vector<32x128xf32>
    %64 = arith.subf %60, %63 : vector<32x128xf32>
    %65 = math.exp %64 : vector<32x128xf32>
    %cst_22 = arith.constant dense<0.000000e+00> : vector<32xf32>
    %66 = vector.multi_reduction <add>, %65, %cst_22 [1] : vector<32x128xf32> to vector<32xf32>
    %67 = vector.shape_cast %66 : vector<32xf32> to vector<32x1xf32>
    %68 = vector.broadcast %67 : vector<32x1xf32> to vector<32x128xf32>
    %69 = arith.divf %65, %68 : vector<32x128xf32>
    %cst_23 = arith.constant 9.99999968E-21 : f32
    %70 = vector.broadcast %cst_23 : f32 to vector<32x128xf32>
    %71 = arith.addf %69, %70 : vector<32x128xf32>
    %72 = math.log %71 : vector<32x128xf32>
    %cst_24 = arith.constant -4.85203028 : f32
    %73 = vector.broadcast %cst_24 : f32 to vector<32x128xf32>
    %74 = arith.subf %72, %73 : vector<32x128xf32>
    %75 = arith.mulf %69, %74 : vector<32x128xf32>
    %cst_25 = arith.constant dense<0.000000e+00> : vector<32xf32>
    %76 = vector.multi_reduction <add>, %75, %cst_25 [1] : vector<32x128xf32> to vector<32xf32>
    %77 = vector.shape_cast %76 : vector<32xf32> to vector<32x1xf32>
    %cst_26 = arith.constant dense<0.000000e+00> : vector<1xf32>
    %78 = vector.multi_reduction <add>, %77, %cst_26 [0] : vector<32x1xf32> to vector<1xf32>
    %79 = vector.shape_cast %78 : vector<1xf32> to vector<1x1xf32>
    %cst_27 = arith.constant 3.125000e-02 : f32
    %80 = vector.broadcast %cst_27 : f32 to vector<1x1xf32>
    %81 = arith.mulf %79, %80 : vector<1x1xf32>
    %c0_28 = arith.constant 0 : index
    %c0_29 = arith.constant 0 : index
    %82 = vector.load %arg11[%c0_28, %c0_29] : memref<1x1xf32, #tpu.memory_space<vmem>>, vector<1x1xf32>
    tpu.vector_store %arg11[%c0_28, %c0_29], %81 {strides = array<i32>} : memref<1x1xf32, #tpu.memory_space<vmem>>, vector<1x1xf32>,
    %c0_30 = arith.constant 0 : index
    %c0_31 = arith.constant 0 : index
    %83 = vector.load %arg1[%c0_30, %c0_31] : memref<32x128xf32, #tpu.memory_space<vmem>>, vector<32x128xf32>
    %84 = arith.addf %60, %83 : vector<32x128xf32>
    %cst_32 = arith.constant dense<0xFF800000> : vector<32xf32>
    %85 = vector.multi_reduction <maximumf>, %84, %cst_32 [1] : vector<32x128xf32> to vector<32xf32>
    %86 = vector.shape_cast %85 : vector<32xf32> to vector<32x1xf32>
    %87 = tpu.iota {dimensions = array<i32: 1>} : vector<32x128xi32>
    %88 = arith.sitofp %87 : vector<32x128xi32> to vector<32x128xf32>
    %89 = vector.broadcast %86 : vector<32x1xf32> to vector<32x128xf32>
    %90 = arith.cmpf oge, %84, %89 : vector<32x128xf32>
    %cst_33 = arith.constant 1.280000e+02 : f32
    %91 = vector.broadcast %cst_33 : f32 to vector<32x128xf32>
    %92 = arith.select %90, %88, %91 : vector<32x128xi1>, vector<32x128xf32>
    %cst_34 = arith.constant dense<0x7F800000> : vector<32xf32>
    %93 = vector.multi_reduction <minimumf>, %92, %cst_34 [1] : vector<32x128xf32> to vector<32xf32>
    %94 = vector.shape_cast %93 : vector<32xf32> to vector<32x1xf32>
    %95 = vector.broadcast %94 : vector<32x1xf32> to vector<32x128xf32>
    %96 = arith.cmpf oeq, %88, %95 : vector<32x128xf32>
    %97 = arith.extui %96 : vector<32x128xi1> to vector<32x128xi32>
    %98 = arith.sitofp %97 : vector<32x128xi32> to vector<32x128xf32>
    %c0_35 = arith.constant 0 : index
    %c0_36 = arith.constant 0 : index
    %99 = vector.load %arg6[%c0_35, %c0_36] : memref<128x32xf32, #tpu.memory_space<vmem>>, vector<128x32xf32>
    %cst_37 = arith.constant dense<0.000000e+00> : vector<32x32xf32>
    %100 = tpu.matmul %98, %99, %cst_37 {dimension_numbers = #tpu.dot_dimension_numbers<[1], [0], [0], [1], [0, 0, 1, 1], [], []>} : vector<32x128xf32>, vector<128x32xf32>, vector<32x32xf32> -> vector<32x32xf32>
    %c0_38 = arith.constant 0 : index
    %c0_39 = arith.constant 0 : index
    %101 = vector.load %arg7[%c0_38, %c0_39] : memref<1x32xf32, #tpu.memory_space<vmem>>, vector<1x32xf32>
    %102 = vector.broadcast %101 : vector<1x32xf32> to vector<32x32xf32>
    %103 = arith.addf %100, %102 : vector<32x32xf32>
    %104 = tpu.iota {dimensions = array<i32: 0>} : vector<64x32xi32>
    %105 = tpu.iota {dimensions = array<i32: 1>} : vector<64x32xi32>
    %106 = tpu.iota {dimensions = array<i32: 0>} : vector<32x16xi32>
    %107 = tpu.iota {dimensions = array<i32: 1>} : vector<32x16xi32>
    %c2_i32_40 = arith.constant 2 : i32
    %108 = vector.broadcast %c2_i32_40 : i32 to vector<64x32xi32>
    %109 = arith.muli %108, %105 : vector<64x32xi32>
    %c0_i32_41 = arith.constant 0 : i32
    %110 = vector.broadcast %c0_i32_41 : i32 to vector<64x32xi32>
    %111 = arith.addi %109, %110 : vector<64x32xi32>
    %112 = arith.cmpi eq, %104, %111 : vector<64x32xi32>
    %113 = arith.extui %112 : vector<64x32xi1> to vector<64x32xi32>
    %114 = arith.sitofp %113 : vector<64x32xi32> to vector<64x32xf32>
    %c0_i32_42 = arith.constant 0 : i32
    %115 = vector.broadcast %c0_i32_42 : i32 to vector<32x16xi32>
    %116 = arith.addi %115, %107 : vector<32x16xi32>
    %117 = arith.cmpi eq, %106, %116 : vector<32x16xi32>
    %118 = arith.extui %117 : vector<32x16xi1> to vector<32x16xi32>
    %119 = arith.sitofp %118 : vector<32x16xi32> to vector<32x16xf32>
    %cst_43 = arith.constant dense<0.000000e+00> : vector<64x32xf32>
    %120 = tpu.matmul %114, %103, %cst_43 {dimension_numbers = #tpu.dot_dimension_numbers<[1], [0], [0], [1], [0, 0, 1, 1], [], []>} : vector<64x32xf32>, vector<32x32xf32>, vector<64x32xf32> -> vector<64x32xf32>
    %cst_44 = arith.constant dense<0.000000e+00> : vector<64x16xf32>
    %121 = tpu.matmul %120, %119, %cst_44 {dimension_numbers = #tpu.dot_dimension_numbers<[1], [0], [0], [1], [0, 0, 1, 1], [], []>} : vector<64x32xf32>, vector<32x16xf32>, vector<64x16xf32> -> vector<64x16xf32>
    %c2_i32_45 = arith.constant 2 : i32
    %122 = vector.broadcast %c2_i32_45 : i32 to vector<64x32xi32>
    %123 = arith.muli %122, %105 : vector<64x32xi32>
    %c1_i32_46 = arith.constant 1 : i32
    %124 = vector.broadcast %c1_i32_46 : i32 to vector<64x32xi32>
    %125 = arith.addi %123, %124 : vector<64x32xi32>
    %126 = arith.cmpi eq, %104, %125 : vector<64x32xi32>
    %127 = arith.extui %126 : vector<64x32xi1> to vector<64x32xi32>
    %128 = arith.sitofp %127 : vector<64x32xi32> to vector<64x32xf32>
    %c16_i32_47 = arith.constant 16 : i32
    %129 = vector.broadcast %c16_i32_47 : i32 to vector<32x16xi32>
    %130 = arith.addi %129, %107 : vector<32x16xi32>
    %131 = arith.cmpi eq, %106, %130 : vector<32x16xi32>
    %132 = arith.extui %131 : vector<32x16xi1> to vector<32x16xi32>
    %133 = arith.sitofp %132 : vector<32x16xi32> to vector<32x16xf32>
    %cst_48 = arith.constant dense<0.000000e+00> : vector<64x32xf32>
    %134 = tpu.matmul %128, %103, %cst_48 {dimension_numbers = #tpu.dot_dimension_numbers<[1], [0], [0], [1], [0, 0, 1, 1], [], []>} : vector<64x32xf32>, vector<32x32xf32>, vector<64x32xf32> -> vector<64x32xf32>
    %cst_49 = arith.constant dense<0.000000e+00> : vector<64x16xf32>
    %135 = tpu.matmul %134, %133, %cst_49 {dimension_numbers = #tpu.dot_dimension_numbers<[1], [0], [0], [1], [0, 0, 1, 1], [], []>} : vector<64x32xf32>, vector<32x16xf32>, vector<64x16xf32> -> vector<64x16xf32>
    %136 = arith.addf %121, %135 : vector<64x16xf32>
    %c0_50 = arith.constant 0 : index
    %c0_51 = arith.constant 0 : index
    %137 = vector.load %arg8[%c0_50, %c0_51] : memref<16x192xf32, #tpu.memory_space<vmem>>, vector<16x192xf32>
    %c0_52 = arith.constant 0 : index
    %c0_53 = arith.constant 0 : index
    %138 = vector.load %arg9[%c0_52, %c0_53] : memref<16x1xf32, #tpu.memory_space<vmem>>, vector<16x1xf32>
    %cst_54 = arith.constant dense<0.000000e+00> : vector<64x16xf32>
    %139 = tpu.matmul %136, %6, %cst_54 {dimension_numbers = #tpu.dot_dimension_numbers<[1], [0], [0], [1], [0, 0, 1, 1], [], []>} : vector<64x16xf32>, vector<16x16xf32>, vector<64x16xf32> -> vector<64x16xf32>
    %cst_55 = arith.constant dense<0.000000e+00> : vector<64x16xf32>
    %140 = tpu.matmul %136, %11, %cst_55 {dimension_numbers = #tpu.dot_dimension_numbers<[1], [0], [0], [1], [0, 0, 1, 1], [], []>} : vector<64x16xf32>, vector<16x16xf32>, vector<64x16xf32> -> vector<64x16xf32>
    %141 = tpu.concatenate %139, %136, %140 in 0 : vector<64x16xf32>, vector<64x16xf32>, vector<64x16xf32> -> vector<192x16xf32>
    %cst_56 = arith.constant dense<0.000000e+00> : vector<16x16xf32>
    %142 = tpu.matmul %137, %141, %cst_56 {dimension_numbers = #tpu.dot_dimension_numbers<[1], [0], [0], [1], [0, 0, 1, 1], [], []>} : vector<16x192xf32>, vector<192x16xf32>, vector<16x16xf32> -> vector<16x16xf32>
    %143 = vector.broadcast %138 : vector<16x1xf32> to vector<16x16xf32>
    %144 = arith.addf %142, %143 : vector<16x16xf32>
    %c0_57 = arith.constant 0 : index
    %c0_58 = arith.constant 0 : index
    %145 = vector.load %arg10[%c0_57, %c0_58] : memref<16x16xf32, #tpu.memory_space<vmem>>, vector<16x16xf32>
    tpu.vector_store %arg10[%c0_57, %c0_58], %144 {strides = array<i32>} : memref<16x16xf32, #tpu.memory_space<vmem>>, vector<16x16xf32>,
    return
  }
}

</mosaic_0001>

<llo_original>
// kernel: model_forward.1
$region0: #{model_forward.1}
  #allocation0 [shape = 'u32[]', space=smem, size = 0x4, offset = 0x4, fixed_abs, tag = 'smem constant byte address 0x4 - core index']
  #allocation1 [shape = 'u32[144,128]{1,0:T(1,128)}', space=vmem, size = 0x12000, scoped, tag = 'internal scratch']
  %s0 = inlined_call_operand.vmem [shape: f32[16,16], index: 0, kind: input, shape index: {}]
  %s1 = inlined_call_operand.vmem [shape: f32[32,128], index: 1, kind: input, shape index: {}]
  %s2 = inlined_call_operand.vmem [shape: f32[64,48], index: 2, kind: input, shape index: {}]
  %s3 = inlined_call_operand.vmem [shape: f32[64,1], index: 3, kind: input, shape index: {}]
  %s4 = inlined_call_operand.vmem [shape: f32[32,128], index: 4, kind: input, shape index: {}]
  %s5 = inlined_call_operand.vmem [shape: f32[1,128], index: 5, kind: input, shape index: {}]
  %s6 = inlined_call_operand.vmem [shape: f32[128,32], index: 6, kind: input, shape index: {}]
  %s7 = inlined_call_operand.vmem [shape: f32[1,32], index: 7, kind: input, shape index: {}]
  %s8 = inlined_call_operand.vmem [shape: f32[16,192], index: 8, kind: input, shape index: {}]
  %s9 = inlined_call_operand.vmem [shape: f32[16,1], index: 9, kind: input, shape index: {}]
  %s10 = inlined_call_operand.hbm [shape: f32[16,16], index: 10, kind: output, shape index: {0}]
  %s11 = inlined_call_operand.hbm [shape: f32[1,1], index: 11, kind: output, shape index: {1}]
  %12 = xla_tuple %s10, %s11
  %s13 = sld [smem:[#allocation0]]
  $region58: #{model_forward.1} parent=0
    _
  %s15 = ssub.s32 1, %s13
  %s16 = scalar_select 0, %s15, %s13
  $region1: #{model_forward.1} parent=0
    #allocation2 [shape = 'u8[8192]{0}', space=vmem, size = 0x2000, scoped, tag = 'output window, operand 0, single buffered']
    #allocation3 [shape = 's32[1]{0}', space=sflag, size = 0x4, scoped, tag = 'scoped memory for model_forward.1']
    #allocation4 [shape = 'u8[512]{0}', space=vmem, size = 0x400, scoped, tag = 'output window, operand 1, single buffered']
    #allocation5 [shape = 's32[1]{0}', space=sflag, size = 0x4, scoped, tag = 'scoped memory for model_forward.1']
    %17 = vsyncpa [#allocation3], 0
    %18 = vsyncpa [#allocation5], 0
    // Predicated region
    $region2: #{model_forward.1} parent=1 // pred_check
      _
    $region3: #{model_forward.1} parent=1 // pred_check_branch
      %20 = sbr.rel (0) target = $region5
    $region4: #{model_forward.1} parent=1 // pred_region
      _
    $region5: #{model_forward.1} parent=1 // pred_fallthru
      _
    // Predicated region
    $region6: #{model_forward.1} parent=1 // pred_check
      _
    $region7: #{model_forward.1} parent=1 // pred_check_branch
      %22 = sbr.rel (0) target = $region9
    $region8: #{model_forward.1} parent=1 // pred_region
      _
    $region9: #{model_forward.1} parent=1 // pred_fallthru
      _
    // Predicated region
    $region10: #{model_forward.1} parent=1 // pred_check
      _
    $region11: #{model_forward.1} parent=1 // pred_check_branch
      %24 = sbr.rel (0) target = $region13
    $region12: #{model_forward.1} parent=1 // pred_region
      _
    $region13: #{model_forward.1} parent=1 // pred_fallthru
      _
    // Predicated region
    $region14: #{model_forward.1} parent=1 // pred_check
      _
    $region15: #{model_forward.1} parent=1 // pred_check_branch
      %26 = sbr.rel (0) target = $region17
    $region16: #{model_forward.1} parent=1 // pred_region
      _
    $region17: #{model_forward.1} parent=1 // pred_fallthru
      _
    // Predicated region
    $region18: #{model_forward.1} parent=1 // pred_check
      _
    $region19: #{model_forward.1} parent=1 // pred_check_branch
      %28 = sbr.rel (0) target = $region21
    $region20: #{model_forward.1} parent=1 // pred_region
      _
    $region21: #{model_forward.1} parent=1 // pred_fallthru
      _
    // Predicated region
    $region22: #{model_forward.1} parent=1 // pred_check
      _
    $region23: #{model_forward.1} parent=1 // pred_check_branch
      %30 = sbr.rel (0) target = $region25
    $region24: #{model_forward.1} parent=1 // pred_region
      _
    $region25: #{model_forward.1} parent=1 // pred_fallthru
      _
    // Predicated region
    $region26: #{model_forward.1} parent=1 // pred_check
      _
    $region27: #{model_forward.1} parent=1 // pred_check_branch
      %32 = sbr.rel (0) target = $region29
    $region28: #{model_forward.1} parent=1 // pred_region
      _
    $region29: #{model_forward.1} parent=1 // pred_fallthru
      _
    // Predicated region
    $region30: #{model_forward.1} parent=1 // pred_check
      _
    $region31: #{model_forward.1} parent=1 // pred_check_branch
      %34 = sbr.rel (0) target = $region33
    $region32: #{model_forward.1} parent=1 // pred_region
      _
    $region33: #{model_forward.1} parent=1 // pred_fallthru
      _
    // Predicated region
    $region34: #{model_forward.1} parent=1 // pred_check
      _
    $region35: #{model_forward.1} parent=1 // pred_check_branch
      %36 = sbr.rel (0) target = $region37
    $region36: #{model_forward.1} parent=1 // pred_region
      _
    $region37: #{model_forward.1} parent=1 // pred_fallthru
      _
    // Predicated region
    $region38: #{model_forward.1} parent=1 // pred_check
      _
    $region39: #{model_forward.1} parent=1 // pred_check_branch
      %38 = sbr.rel (0) target = $region41
    $region40: #{model_forward.1} parent=1 // pred_region
      _
    $region41: #{model_forward.1} parent=1 // pred_fallthru
      _
    %v39 = vlaneseq
    %v40 = vshrl.u32 %v39, 7
    %v41 = vadd.s32 %v40, 8
    %v42 = vlaneseq
    %v43 = vand.u32 %v42, 127
    %v44 = vsub.s32 %v43, 1
    %vm45 = vcmp.eq.s32.totalorder %v40, %v44
    %vm46 = vcmp.eq.s32.totalorder %v41, %v44
    %v47 = vsel %vm45, 1, 0
    %v48 = vsel %vm46, 1, 0
    %v49 = vcvt.s32.f32 %v47
    %v50 = vcvt.s32.f32 %v48
    %v51 = vadd.s32 %v43, 1
    %vm52 = vcmp.eq.s32.totalorder %v40, %v51
    %vm53 = vcmp.eq.s32.totalorder %v41, %v51
    %v54 = vsel %vm52, 1, 0
    %v55 = vsel %vm53, 1, 0
    %v56 = vcvt.s32.f32 %v54
    %v57 = vcvt.s32.f32 %v55
    %v58 = vld [vmem:[%s0] sm:$0xff]
    %v59 = vld [vmem:[%s0 + $0x8] sm:$0xff]
    %v60 = vld [vmem:[%s2] sm:$0xff]
    %v61 = vld [vmem:[%s2 + $0x8] sm:$0xff]
    %v62 = vld [vmem:[%s2 + $0x10] sm:$0xff]
    %v63 = vld [vmem:[%s2 + $0x18] sm:$0xff]
    %v64 = vld [vmem:[%s2 + $0x20] sm:$0xff]
    %v65 = vld [vmem:[%s2 + $0x28] sm:$0xff]
    %v66 = vld [vmem:[%s2 + $0x30] sm:$0xff]
    %v67 = vld [vmem:[%s2 + $0x38] sm:$0xff]
    %v68 = vld [vmem:[%s3] sm:$0xff]
    %v69 = vld [vmem:[%s3 + $0x8] sm:$0xff]
    %v70 = vld [vmem:[%s3 + $0x10] sm:$0xff]
    %v71 = vld [vmem:[%s3 + $0x18] sm:$0xff]
    %v72 = vld [vmem:[%s3 + $0x20] sm:$0xff]
    %v73 = vld [vmem:[%s3 + $0x28] sm:$0xff]
    %v74 = vld [vmem:[%s3 + $0x30] sm:$0xff]
    %v75 = vld [vmem:[%s3 + $0x38] sm:$0xff]
    %vm76 = vcmask 130048
    %v78 = vsel %vm76, %v58, 0
    %v81 = vsel %vm76, %v59, 0
    %83 = vmatprep.subr.mxu0 0.0
    %84 = vmatpush1.msra.mxu0 0.0
    %85 = vmatprep.subr.mxu0 0.0
    %86 = vmatpush1.msra.mxu0 0.0
    %87 = vmatprep.subr.mxu0 0.0
    %88 = vmatpush1.msra.mxu0 0.0
    %89 = vmatprep.subr.mxu0 0.0
    %90 = vmatpush1.msra.mxu0 0.0
    %91 = vmatprep.subr.mxu0 0.0
    %92 = vmatpush1.msra.mxu0 0.0
    %93 = vmatprep.subr.mxu0 0.0
    %94 = vmatpush1.msra.mxu0 0.0
    %95 = vmatprep.subr.mxu0 0.0
    %96 = vmatpush1.msra.mxu0 0.0
    %97 = vmatprep.subr.mxu0 0.0
    %98 = vmatpush1.msra.mxu0 0.0
    %99 = vmatprep.subr.mxu0 0.0
    %100 = vmatpush1.msra.mxu0 0.0
    %101 = vmatprep.subr.mxu0 0.0
    %102 = vmatpush1.msra.mxu0 0.0
    %103 = vmatprep.subr.mxu0 0.0
    %104 = vmatpush1.msra.mxu0 0.0
    %105 = vmatprep.subr.mxu0 0.0
    %106 = vmatpush1.msra.mxu0 0.0
    %107 = vmatprep.subr.mxu0 0.0
    %108 = vmatpush1.msra.mxu0 0.0
    %109 = vmatprep.subr.mxu0 0.0
    %110 = vmatpush1.msra.mxu0 0.0
    %111 = vmatprep.subr.mxu0 0.0
    %112 = vmatpush1.msra.mxu0 %v50
    %113 = vmatprep.subr.mxu0 0.0
    %114 = vmatpush1.msra.mxu0 %v49
    %115 = vmatprep.subr.mxu0 0.0
    %116 = vmatpush2.msra.mxu0 0.0
    %117 = vmatprep.subr.mxu0 0.0
    %118 = vmatpush2.msra.mxu0 0.0
    %119 = vmatprep.subr.mxu0 0.0
    %120 = vmatpush2.msra.mxu0 0.0
    %121 = vmatprep.subr.mxu0 0.0
    %122 = vmatpush2.msra.mxu0 0.0
    %123 = vmatprep.subr.mxu0 0.0
    %124 = vmatpush2.msra.mxu0 0.0
    %125 = vmatprep.subr.mxu0 0.0
    %126 = vmatpush2.msra.mxu0 0.0
    %127 = vmatprep.subr.mxu0 0.0
    %128 = vmatpush2.msra.mxu0 0.0
    %129 = vmatprep.subr.mxu0 0.0
    %130 = vmatpush2.msra.mxu0 0.0
    %131 = vmatprep.subr.mxu0 0.0
    %132 = vmatpush2.msra.mxu0 0.0
    %133 = vmatprep.subr.mxu0 0.0
    %134 = vmatpush2.msra.mxu0 0.0
    %135 = vmatprep.subr.mxu0 0.0
    %136 = vmatpush2.msra.mxu0 0.0
    %137 = vmatprep.subr.mxu0 0.0
    %138 = vmatpush2.msra.mxu0 0.0
    %139 = vmatprep.subr.mxu0 0.0
    %140 = vmatpush2.msra.mxu0 0.0
    %141 = vmatprep.subr.mxu0 0.0
    %142 = vmatpush2.msra.mxu0 0.0
    %143 = vmatprep.subr.mxu0 0.0
    %144 = vmatpush2.msra.mxu0 0.0
    %145 = vmatprep.subr.mxu0 0.0
    %146 = vmatpush2.msra.mxu0 0.0
    %147 = vmatprep.mubr.f32.mxu0 0.0
    %148 = vmatmul.mubr.f32.gmra.mxu0 %v78
    %v149 = vpop.f32.mrf.mxu0
    %v150 = vadd.f32 0.0, %v149
    %v151 = vpop.f32.mrf.mxu0
    %152 = vmatprep.mubr.f32.mxu0 0.0
    %153 = vmatmul.mubr.f32.gmra.mxu0 %v81
    %v154 = vpop.f32.mrf.mxu0
    %v155 = vadd.f32 0.0, %v154
    %v156 = vpop.f32.mrf.mxu0
    %157 = vdwg.mxu0
    %158 = vmatprep.subr.mxu0 0.0
    %159 = vmatpush1.msra.mxu0 0.0
    %160 = vmatprep.subr.mxu0 0.0
    %161 = vmatpush1.msra.mxu0 0.0
    %162 = vmatprep.subr.mxu0 0.0
    %163 = vmatpush1.msra.mxu0 0.0
    %164 = vmatprep.subr.mxu0 0.0
    %165 = vmatpush1.msra.mxu0 0.0
    %166 = vmatprep.subr.mxu0 0.0
    %167 = vmatpush1.msra.mxu0 0.0
    %168 = vmatprep.subr.mxu0 0.0
    %169 = vmatpush1.msra.mxu0 0.0
    %170 = vmatprep.subr.mxu0 0.0
    %171 = vmatpush1.msra.mxu0 0.0
    %172 = vmatprep.subr.mxu0 0.0
    %173 = vmatpush1.msra.mxu0 0.0
    %174 = vmatprep.subr.mxu0 0.0
    %175 = vmatpush1.msra.mxu0 0.0
    %176 = vmatprep.subr.mxu0 0.0
    %177 = vmatpush1.msra.mxu0 0.0
    %178 = vmatprep.subr.mxu0 0.0
    %179 = vmatpush1.msra.mxu0 0.0
    %180 = vmatprep.subr.mxu0 0.0
    %181 = vmatpush1.msra.mxu0 0.0
    %182 = vmatprep.subr.mxu0 0.0
    %183 = vmatpush1.msra.mxu0 0.0
    %184 = vmatprep.subr.mxu0 0.0
    %185 = vmatpush1.msra.mxu0 0.0
    %186 = vmatprep.subr.mxu0 0.0
    %187 = vmatpush1.msra.mxu0 %v57
    %188 = vmatprep.subr.mxu0 0.0
    %189 = vmatpush1.msra.mxu0 %v56
    %190 = vmatprep.subr.mxu0 0.0
    %191 = vmatpush2.msra.mxu0 0.0
    %192 = vmatprep.subr.mxu0 0.0
    %193 = vmatpush2.msra.mxu0 0.0
    %194 = vmatprep.subr.mxu0 0.0
    %195 = vmatpush2.msra.mxu0 0.0
    %196 = vmatprep.subr.mxu0 0.0
    %197 = vmatpush2.msra.mxu0 0.0
    %198 = vmatprep.subr.mxu0 0.0
    %199 = vmatpush2.msra.mxu0 0.0
    %200 = vmatprep.subr.mxu0 0.0
    %201 = vmatpush2.msra.mxu0 0.0
    %202 = vmatprep.subr.mxu0 0.0
    %203 = vmatpush2.msra.mxu0 0.0
    %204 = vmatprep.subr.mxu0 0.0
    %205 = vmatpush2.msra.mxu0 0.0
    %206 = vmatprep.subr.mxu0 0.0
    %207 = vmatpush2.msra.mxu0 0.0
    %208 = vmatprep.subr.mxu0 0.0
    %209 = vmatpush2.msra.mxu0 0.0
    %210 = vmatprep.subr.mxu0 0.0
    %211 = vmatpush2.msra.mxu0 0.0
    %212 = vmatprep.subr.mxu0 0.0
    %213 = vmatpush2.msra.mxu0 0.0
    %214 = vmatprep.subr.mxu0 0.0
    %215 = vmatpush2.msra.mxu0 0.0
    %216 = vmatprep.subr.mxu0 0.0
    %217 = vmatpush2.msra.mxu0 0.0
    %218 = vmatprep.subr.mxu0 0.0
    %219 = vmatpush2.msra.mxu0 0.0
    %220 = vmatprep.subr.mxu0 0.0
    %221 = vmatpush2.msra.mxu0 0.0
    %222 = vmatprep.mubr.f32.mxu0 0.0
    %223 = vmatmul.mubr.f32.gmra.mxu0 %v78
    %v224 = vpop.f32.mrf.mxu0
    %v225 = vadd.f32 0.0, %v224
    %v226 = vpop.f32.mrf.mxu0
    %227 = vmatprep.mubr.f32.mxu0 0.0
    %228 = vmatmul.mubr.f32.gmra.mxu0 %v81
    %v229 = vpop.f32.mrf.mxu0
    %v230 = vadd.f32 0.0, %v229
    %v231 = vpop.f32.mrf.mxu0
    %232 = vdwg.mxu0
    %234 = vset.pattern.permute.xlu0 0
    %235 = vperm.xlu0 %234, %v68
    %v236 = vpop.permute.xlu0 %235
    %239 = vset.pattern.permute.xlu0 0
    %240 = vperm.xlu0 %239, %v69
    %v241 = vpop.permute.xlu0 %240
    %244 = vset.pattern.permute.xlu0 0
    %245 = vperm.xlu0 %244, %v70
    %v246 = vpop.permute.xlu0 %245
    %249 = vset.pattern.permute.xlu0 0
    %250 = vperm.xlu0 %249, %v71
    %v251 = vpop.permute.xlu0 %250
    %254 = vset.pattern.permute.xlu0 0
    %255 = vperm.xlu0 %254, %v72
    %v256 = vpop.permute.xlu0 %255
    %259 = vset.pattern.permute.xlu0 0
    %260 = vperm.xlu0 %259, %v73
    %v261 = vpop.permute.xlu0 %260
    %264 = vset.pattern.permute.xlu0 0
    %265 = vperm.xlu0 %264, %v74
    %v266 = vpop.permute.xlu0 %265
    %269 = vset.pattern.permute.xlu0 0
    %270 = vperm.xlu0 %269, %v75
    %v271 = vpop.permute.xlu0 %270
    %vm273 = vcmask 392192
    %v275 = vsel %vm273, %v60, 0
    %v278 = vsel %vm273, %v61, 0
    %v281 = vsel %vm273, %v62, 0
    %v284 = vsel %vm273, %v63, 0
    %v287 = vsel %vm273, %v64, 0
    %v290 = vsel %vm273, %v65, 0
    %v293 = vsel %vm273, %v66, 0
    %v296 = vsel %vm273, %v67, 0
    %298 = vmatprep.subr.mxu0 0.0
    %299 = vmatpush1.msra.mxu0 0.0
    %300 = vmatprep.subr.mxu0 0.0
    %301 = vmatpush1.msra.mxu0 0.0
    %302 = vmatprep.subr.mxu0 0.0
    %303 = vmatpush1.msra.mxu0 0.0
    %304 = vmatprep.subr.mxu0 0.0
    %305 = vmatpush1.msra.mxu0 0.0
    %306 = vmatprep.subr.mxu0 0.0
    %307 = vmatpush1.msra.mxu0 0.0
    %308 = vmatprep.subr.mxu0 0.0
    %309 = vmatpush1.msra.mxu0 0.0
    %310 = vmatprep.subr.mxu0 0.0
    %311 = vmatpush1.msra.mxu0 0.0
    %312 = vmatprep.subr.mxu0 0.0
    %313 = vmatpush1.msra.mxu0 0.0
    %314 = vmatprep.subr.mxu0 0.0
    %315 = vmatpush1.msra.mxu0 0.0
    %316 = vmatprep.subr.mxu0 0.0
    %317 = vmatpush1.msra.mxu0 0.0
    %318 = vmatprep.subr.mxu0 0.0
    %319 = vmatpush1.msra.mxu0 %v230
    %320 = vmatprep.subr.mxu0 0.0
    %321 = vmatpush1.msra.mxu0 %v225
    %322 = vmatprep.subr.mxu0 0.0
    %323 = vmatpush1.msra.mxu0 %v59
    %324 = vmatprep.subr.mxu0 0.0
    %325 = vmatpush1.msra.mxu0 %v58
    %326 = vmatprep.subr.mxu0 0.0
    %327 = vmatpush1.msra.mxu0 %v155
    %328 = vmatprep.subr.mxu0 0.0
    %329 = vmatpush1.msra.mxu0 %v150
    %330 = vmatprep.subr.mxu0 0.0
    %331 = vmatpush2.msra.mxu0 0.0
    %332 = vmatprep.subr.mxu0 0.0
    %333 = vmatpush2.msra.mxu0 0.0
    %334 = vmatprep.subr.mxu0 0.0
    %335 = vmatpush2.msra.mxu0 0.0
    %336 = vmatprep.subr.mxu0 0.0
    %337 = vmatpush2.msra.mxu0 0.0
    %338 = vmatprep.subr.mxu0 0.0
    %339 = vmatpush2.msra.mxu0 0.0
    %340 = vmatprep.subr.mxu0 0.0
    %341 = vmatpush2.msra.mxu0 0.0
    %342 = vmatprep.subr.mxu0 0.0
    %343 = vmatpush2.msra.mxu0 0.0
    %344 = vmatprep.subr.mxu0 0.0
    %345 = vmatpush2.msra.mxu0 0.0
    %346 = vmatprep.subr.mxu0 0.0
    %347 = vmatpush2.msra.mxu0 0.0
    %348 = vmatprep.subr.mxu0 0.0
    %349 = vmatpush2.msra.mxu0 0.0
    %350 = vmatprep.subr.mxu0 0.0
    %351 = vmatpush2.msra.mxu0 0.0
    %352 = vmatprep.subr.mxu0 0.0
    %353 = vmatpush2.msra.mxu0 0.0
    %354 = vmatprep.subr.mxu0 0.0
    %355 = vmatpush2.msra.mxu0 0.0
    %356 = vmatprep.subr.mxu0 0.0
    %357 = vmatpush2.msra.mxu0 0.0
    %358 = vmatprep.subr.mxu0 0.0
    %359 = vmatpush2.msra.mxu0 0.0
    %360 = vmatprep.subr.mxu0 0.0
    %361 = vmatpush2.msra.mxu0 0.0
    %362 = vmatprep.mubr.f32.mxu0 0.0
    %363 = vmatmul.mubr.f32.gmra.mxu0 %v275
    %v364 = vpop.f32.mrf.mxu0
    %v365 = vadd.f32 %v236, %v364
    %v366 = vpop.f32.mrf.mxu0
    %367 = vmatprep.mubr.f32.mxu0 0.0
    %368 = vmatmul.mubr.f32.gmra.mxu0 %v278
    %v369 = vpop.f32.mrf.mxu0
    %v370 = vadd.f32 %v241, %v369
    %v371 = vpop.f32.mrf.mxu0
    %372 = vmatprep.mubr.f32.mxu0 0.0
    %373 = vmatmul.mubr.f32.gmra.mxu0 %v281
    %v374 = vpop.f32.mrf.mxu0
    %v375 = vadd.f32 %v246, %v374
    %v376 = vpop.f32.mrf.mxu0
    %377 = vmatprep.mubr.f32.mxu0 0.0
    %378 = vmatmul.mubr.f32.gmra.mxu0 %v284
    %v379 = vpop.f32.mrf.mxu0
    %v380 = vadd.f32 %v251, %v379
    %v381 = vpop.f32.mrf.mxu0
    %382 = vmatprep.mubr.f32.mxu0 0.0
    %383 = vmatmul.mubr.f32.gmra.mxu0 %v287
    %v384 = vpop.f32.mrf.mxu0
    %v385 = vadd.f32 %v256, %v384
    %v386 = vpop.f32.mrf.mxu0
    %387 = vmatprep.mubr.f32.mxu0 0.0
    %388 = vmatmul.mubr.f32.gmra.mxu0 %v290
    %v389 = vpop.f32.mrf.mxu0
    %v390 = vadd.f32 %v261, %v389
    %v391 = vpop.f32.mrf.mxu0
    %392 = vmatprep.mubr.f32.mxu0 0.0
    %393 = vmatmul.mubr.f32.gmra.mxu0 %v293
    %v394 = vpop.f32.mrf.mxu0
    %v395 = vadd.f32 %v266, %v394
    %v396 = vpop.f32.mrf.mxu0
    %397 = vmatprep.mubr.f32.mxu0 0.0
    %398 = vmatmul.mubr.f32.gmra.mxu0 %v296
    %v399 = vpop.f32.mrf.mxu0
    %v400 = vadd.f32 %v271, %v399
    %v401 = vpop.f32.mrf.mxu0
    %402 = vdwg.mxu0
    %v403 = vmax.f32 %v365, 0.0
    %v404 = vmax.f32 %v370, 0.0
    %v405 = vmax.f32 %v375, 0.0
    %v406 = vmax.f32 %v380, 0.0
    %v407 = vmax.f32 %v385, 0.0
    %v408 = vmax.f32 %v390, 0.0
    %v409 = vmax.f32 %v395, 0.0
    %v410 = vmax.f32 %v400, 0.0
    %v411 = vadd.s32 %v40, 16
    %v412 = vadd.s32 %v40, 24
    %v413 = vmul.u32 %v40, 2
    %v414 = vmul.u32 %v41, 2
    %v415 = vmul.u32 %v411, 2
    %v416 = vmul.u32 %v412, 2
    %vm417 = vcmp.eq.s32.totalorder %v43, %v413
    %vm418 = vcmp.eq.s32.totalorder %v43, %v414
    %vm419 = vcmp.eq.s32.totalorder %v43, %v415
    %vm420 = vcmp.eq.s32.totalorder %v43, %v416
    %v421 = vsel %vm417, 1, 0
    %v422 = vsel %vm418, 1, 0
    %v423 = vsel %vm419, 1, 0
    %v424 = vsel %vm420, 1, 0
    %v425 = vcvt.s32.f32 %v421
    %v426 = vcvt.s32.f32 %v422
    %v427 = vcvt.s32.f32 %v423
    %v428 = vcvt.s32.f32 %v424
    %vm429 = vcmp.eq.s32.totalorder %v43, %v40
    %vm430 = vcmp.eq.s32.totalorder %v43, %v41
    %v431 = vsel %vm429, 1, 0
    %v432 = vsel %vm430, 1, 0
    %v433 = vcvt.s32.f32 %v431
    %v434 = vcvt.s32.f32 %v432
    %vm435 = vcmask 523264
    %v437 = vsel %vm435, %v425, 0
    %v440 = vsel %vm435, %v426, 0
    %v443 = vsel %vm435, %v427, 0
    %v446 = vsel %vm435, %v428, 0
    %448 = vmatprep.subr.mxu0 0.0
    %449 = vmatpush1.msra.mxu0 0.0
    %450 = vmatprep.subr.mxu0 0.0
    %451 = vmatpush1.msra.mxu0 0.0
    %452 = vmatprep.subr.mxu0 0.0
    %453 = vmatpush1.msra.mxu0 0.0
    %454 = vmatprep.subr.mxu0 0.0
    %455 = vmatpush1.msra.mxu0 0.0
    %456 = vmatprep.subr.mxu0 0.0
    %457 = vmatpush1.msra.mxu0 0.0
    %458 = vmatprep.subr.mxu0 0.0
    %459 = vmatpush1.msra.mxu0 0.0
    %460 = vmatprep.subr.mxu0 0.0
    %461 = vmatpush1.msra.mxu0 0.0
    %462 = vmatprep.subr.mxu0 0.0
    %463 = vmatpush1.msra.mxu0 0.0
    %464 = vmatprep.subr.mxu0 0.0
    %465 = vmatpush1.msra.mxu0 %v410
    %466 = vmatprep.subr.mxu0 0.0
    %467 = vmatpush1.msra.mxu0 %v409
    %468 = vmatprep.subr.mxu0 0.0
    %469 = vmatpush1.msra.mxu0 %v408
    %470 = vmatprep.subr.mxu0 0.0
    %471 = vmatpush1.msra.mxu0 %v407
    %472 = vmatprep.subr.mxu0 0.0
    %473 = vmatpush1.msra.mxu0 %v406
    %474 = vmatprep.subr.mxu0 0.0
    %475 = vmatpush1.msra.mxu0 %v405
    %476 = vmatprep.subr.mxu0 0.0
    %477 = vmatpush1.msra.mxu0 %v404
    %478 = vmatprep.subr.mxu0 0.0
    %479 = vmatpush1.msra.mxu0 %v403
    %480 = vmatprep.subr.mxu0 0.0
    %481 = vmatpush2.msra.mxu0 0.0
    %482 = vmatprep.subr.mxu0 0.0
    %483 = vmatpush2.msra.mxu0 0.0
    %484 = vmatprep.subr.mxu0 0.0
    %485 = vmatpush2.msra.mxu0 0.0
    %486 = vmatprep.subr.mxu0 0.0
    %487 = vmatpush2.msra.mxu0 0.0
    %488 = vmatprep.subr.mxu0 0.0
    %489 = vmatpush2.msra.mxu0 0.0
    %490 = vmatprep.subr.mxu0 0.0
    %491 = vmatpush2.msra.mxu0 0.0
    %492 = vmatprep.subr.mxu0 0.0
    %493 = vmatpush2.msra.mxu0 0.0
    %494 = vmatprep.subr.mxu0 0.0
    %495 = vmatpush2.msra.mxu0 0.0
    %496 = vmatprep.subr.mxu0 0.0
    %497 = vmatpush2.msra.mxu0 0.0
    %498 = vmatprep.subr.mxu0 0.0
    %499 = vmatpush2.msra.mxu0 0.0
    %500 = vmatprep.subr.mxu0 0.0
    %501 = vmatpush2.msra.mxu0 0.0
    %502 = vmatprep.subr.mxu0 0.0
    %503 = vmatpush2.msra.mxu0 0.0
    %504 = vmatprep.subr.mxu0 0.0
    %505 = vmatpush2.msra.mxu0 0.0
    %506 = vmatprep.subr.mxu0 0.0
    %507 = vmatpush2.msra.mxu0 0.0
    %508 = vmatprep.subr.mxu0 0.0
    %509 = vmatpush2.msra.mxu0 0.0
    %510 = vmatprep.subr.mxu0 0.0
    %511 = vmatpush2.msra.mxu0 0.0
    %512 = vmatprep.mubr.f32.mxu0 0.0
    %513 = vmatmul.mubr.f32.gmra.mxu0 %v437
    %v514 = vpop.f32.mrf.mxu0
    %v515 = vadd.f32 0.0, %v514
    %v516 = vpop.f32.mrf.mxu0
    %517 = vmatprep.mubr.f32.mxu0 0.0
    %518 = vmatmul.mubr.f32.gmra.mxu0 %v440
    %v519 = vpop.f32.mrf.mxu0
    %v520 = vadd.f32 0.0, %v519
    %v521 = vpop.f32.mrf.mxu0
    %522 = vmatprep.mubr.f32.mxu0 0.0
    %523 = vmatmul.mubr.f32.gmra.mxu0 %v443
    %v524 = vpop.f32.mrf.mxu0
    %v525 = vadd.f32 0.0, %v524
    %v526 = vpop.f32.mrf.mxu0
    %527 = vmatprep.mubr.f32.mxu0 0.0
    %528 = vmatmul.mubr.f32.gmra.mxu0 %v446
    %v529 = vpop.f32.mrf.mxu0
    %v530 = vadd.f32 0.0, %v529
    %v531 = vpop.f32.mrf.mxu0
    %532 = vdwg.mxu0
    %v533 = vadd.s32 %v413, 1
    %v534 = vadd.s32 %v414, 1
    %v535 = vadd.s32 %v415, 1
    %v536 = vadd.s32 %v416, 1
    %vm537 = vcmp.eq.s32.totalorder %v43, %v533
    %vm538 = vcmp.eq.s32.totalorder %v43, %v534
    %vm539 = vcmp.eq.s32.totalorder %v43, %v535
    %vm540 = vcmp.eq.s32.totalorder %v43, %v536
    %v541 = vsel %vm537, 1, 0
    %v542 = vsel %vm538, 1, 0
    %v543 = vsel %vm539, 1, 0
    %v544 = vsel %vm540, 1, 0
    %v545 = vcvt.s32.f32 %v541
    %v546 = vcvt.s32.f32 %v542
    %v547 = vcvt.s32.f32 %v543
    %v548 = vcvt.s32.f32 %v544
    %v549 = vadd.s32 %v41, 16
    %vm550 = vcmp.eq.s32.totalorder %v43, %v411
    %vm551 = vcmp.eq.s32.totalorder %v43, %v549
    %v552 = vsel %vm550, 1, 0
    %v553 = vsel %vm551, 1, 0
    %v554 = vcvt.s32.f32 %v552
    %v555 = vcvt.s32.f32 %v553
    %v557 = vsel %vm435, %v545, 0
    %v560 = vsel %vm435, %v546, 0
    %v563 = vsel %vm435, %v547, 0
    %v566 = vsel %vm435, %v548, 0
    %568 = vmatprep.subr.mxu0 0.0
    %569 = vmatpush1.msra.mxu0 0.0
    %570 = vmatprep.subr.mxu0 0.0
    %571 = vmatpush1.msra.mxu0 0.0
    %572 = vmatprep.subr.mxu0 0.0
    %573 = vmatpush1.msra.mxu0 0.0
    %574 = vmatprep.subr.mxu0 0.0
    %575 = vmatpush1.msra.mxu0 0.0
    %576 = vmatprep.subr.mxu0 0.0
    %577 = vmatpush1.msra.mxu0 0.0
    %578 = vmatprep.subr.mxu0 0.0
    %579 = vmatpush1.msra.mxu0 0.0
    %580 = vmatprep.subr.mxu0 0.0
    %581 = vmatpush1.msra.mxu0 0.0
    %582 = vmatprep.subr.mxu0 0.0
    %583 = vmatpush1.msra.mxu0 0.0
    %584 = vmatprep.subr.mxu0 0.0
    %585 = vmatpush1.msra.mxu0 %v410
    %586 = vmatprep.subr.mxu0 0.0
    %587 = vmatpush1.msra.mxu0 %v409
    %588 = vmatprep.subr.mxu0 0.0
    %589 = vmatpush1.msra.mxu0 %v408
    %590 = vmatprep.subr.mxu0 0.0
    %591 = vmatpush1.msra.mxu0 %v407
    %592 = vmatprep.subr.mxu0 0.0
    %593 = vmatpush1.msra.mxu0 %v406
    %594 = vmatprep.subr.mxu0 0.0
    %595 = vmatpush1.msra.mxu0 %v405
    %596 = vmatprep.subr.mxu0 0.0
    %597 = vmatpush1.msra.mxu0 %v404
    %598 = vmatprep.subr.mxu0 0.0
    %599 = vmatpush1.msra.mxu0 %v403
    %600 = vmatprep.subr.mxu0 0.0
    %601 = vmatpush2.msra.mxu0 0.0
    %602 = vmatprep.subr.mxu0 0.0
    %603 = vmatpush2.msra.mxu0 0.0
    %604 = vmatprep.subr.mxu0 0.0
    %605 = vmatpush2.msra.mxu0 0.0
    %606 = vmatprep.subr.mxu0 0.0
    %607 = vmatpush2.msra.mxu0 0.0
    %608 = vmatprep.subr.mxu0 0.0
    %609 = vmatpush2.msra.mxu0 0.0
    %610 = vmatprep.subr.mxu0 0.0
    %611 = vmatpush2.msra.mxu0 0.0
    %612 = vmatprep.subr.mxu0 0.0
    %613 = vmatpush2.msra.mxu0 0.0
    %614 = vmatprep.subr.mxu0 0.0
    %615 = vmatpush2.msra.mxu0 0.0
    %616 = vmatprep.subr.mxu0 0.0
    %617 = vmatpush2.msra.mxu0 0.0
    %618 = vmatprep.subr.mxu0 0.0
    %619 = vmatpush2.msra.mxu0 0.0
    %620 = vmatprep.subr.mxu0 0.0
    %621 = vmatpush2.msra.mxu0 0.0
    %622 = vmatprep.subr.mxu0 0.0
    %623 = vmatpush2.msra.mxu0 0.0
    %624 = vmatprep.subr.mxu0 0.0
    %625 = vmatpush2.msra.mxu0 0.0
    %626 = vmatprep.subr.mxu0 0.0
    %627 = vmatpush2.msra.mxu0 0.0
    %628 = vmatprep.subr.mxu0 0.0
    %629 = vmatpush2.msra.mxu0 0.0
    %630 = vmatprep.subr.mxu0 0.0
    %631 = vmatpush2.msra.mxu0 0.0
    %632 = vmatprep.mubr.f32.mxu0 0.0
    %633 = vmatmul.mubr.f32.gmra.mxu0 %v557
    %v634 = vpop.f32.mrf.mxu0
    %v635 = vadd.f32 0.0, %v634
    %v636 = vpop.f32.mrf.mxu0
    %637 = vmatprep.mubr.f32.mxu0 0.0
    %638 = vmatmul.mubr.f32.gmra.mxu0 %v560
    %v639 = vpop.f32.mrf.mxu0
    %v640 = vadd.f32 0.0, %v639
    %v641 = vpop.f32.mrf.mxu0
    %642 = vmatprep.mubr.f32.mxu0 0.0
    %643 = vmatmul.mubr.f32.gmra.mxu0 %v563
    %v644 = vpop.f32.mrf.mxu0
    %v645 = vadd.f32 0.0, %v644
    %v646 = vpop.f32.mrf.mxu0
    %647 = vmatprep.mubr.f32.mxu0 0.0
    %648 = vmatmul.mubr.f32.gmra.mxu0 %v566
    %v649 = vpop.f32.mrf.mxu0
    %v650 = vadd.f32 0.0, %v649
    %v651 = vpop.f32.mrf.mxu0
    %652 = vdwg.mxu0
    %v654 = vsel %vm76, %v635, 0
    %v657 = vsel %vm76, %v640, 0
    %v660 = vsel %vm76, %v645, 0
    %v663 = vsel %vm76, %v650, 0
    %665 = vmatprep.subr.mxu0 0.0
    %666 = vmatpush1.msra.mxu0 0.0
    %667 = vmatprep.subr.mxu0 0.0
    %668 = vmatpush1.msra.mxu0 0.0
    %669 = vmatprep.subr.mxu0 0.0
    %670 = vmatpush1.msra.mxu0 0.0
    %671 = vmatprep.subr.mxu0 0.0
    %672 = vmatpush1.msra.mxu0 0.0
    %673 = vmatprep.subr.mxu0 0.0
    %674 = vmatpush1.msra.mxu0 0.0
    %675 = vmatprep.subr.mxu0 0.0
    %676 = vmatpush1.msra.mxu0 0.0
    %677 = vmatprep.subr.mxu0 0.0
    %678 = vmatpush1.msra.mxu0 0.0
    %679 = vmatprep.subr.mxu0 0.0
    %680 = vmatpush1.msra.mxu0 0.0
    %681 = vmatprep.subr.mxu0 0.0
    %682 = vmatpush1.msra.mxu0 0.0
    %683 = vmatprep.subr.mxu0 0.0
    %684 = vmatpush1.msra.mxu0 0.0
    %685 = vmatprep.subr.mxu0 0.0
    %686 = vmatpush1.msra.mxu0 0.0
    %687 = vmatprep.subr.mxu0 0.0
    %688 = vmatpush1.msra.mxu0 0.0
    %689 = vmatprep.subr.mxu0 0.0
    %690 = vmatpush1.msra.mxu0 0.0
    %691 = vmatprep.subr.mxu0 0.0
    %692 = vmatpush1.msra.mxu0 0.0
    %693 = vmatprep.subr.mxu0 0.0
    %694 = vmatpush1.msra.mxu0 %v555
    %695 = vmatprep.subr.mxu0 0.0
    %696 = vmatpush1.msra.mxu0 %v554
    %697 = vmatprep.subr.mxu0 0.0
    %698 = vmatpush2.msra.mxu0 0.0
    %699 = vmatprep.subr.mxu0 0.0
    %700 = vmatpush2.msra.mxu0 0.0
    %701 = vmatprep.subr.mxu0 0.0
    %702 = vmatpush2.msra.mxu0 0.0
    %703 = vmatprep.subr.mxu0 0.0
    %704 = vmatpush2.msra.mxu0 0.0
    %705 = vmatprep.subr.mxu0 0.0
    %706 = vmatpush2.msra.mxu0 0.0
    %707 = vmatprep.subr.mxu0 0.0
    %708 = vmatpush2.msra.mxu0 0.0
    %709 = vmatprep.subr.mxu0 0.0
    %710 = vmatpush2.msra.mxu0 0.0
    %711 = vmatprep.subr.mxu0 0.0
    %712 = vmatpush2.msra.mxu0 0.0
    %713 = vmatprep.subr.mxu0 0.0
    %714 = vmatpush2.msra.mxu0 0.0
    %715 = vmatprep.subr.mxu0 0.0
    %716 = vmatpush2.msra.mxu0 0.0
    %717 = vmatprep.subr.mxu0 0.0
    %718 = vmatpush2.msra.mxu0 0.0
    %719 = vmatprep.subr.mxu0 0.0
    %720 = vmatpush2.msra.mxu0 0.0
    %721 = vmatprep.subr.mxu0 0.0
    %722 = vmatpush2.msra.mxu0 0.0
    %723 = vmatprep.subr.mxu0 0.0
    %724 = vmatpush2.msra.mxu0 0.0
    %725 = vmatprep.subr.mxu0 0.0
    %726 = vmatpush2.msra.mxu0 0.0
    %727 = vmatprep.subr.mxu0 0.0
    %728 = vmatpush2.msra.mxu0 0.0
    %729 = vmatprep.mubr.f32.mxu0 0.0
    %730 = vmatmul.mubr.f32.gmra.mxu0 %v654
    %v731 = vpop.f32.mrf.mxu0
    %v732 = vadd.f32 0.0, %v731
    %v733 = vpop.f32.mrf.mxu0
    %734 = vmatprep.mubr.f32.mxu0 0.0
    %735 = vmatmul.mubr.f32.gmra.mxu0 %v657
    %v736 = vpop.f32.mrf.mxu0
    %v737 = vadd.f32 0.0, %v736
    %v738 = vpop.f32.mrf.mxu0
    %739 = vmatprep.mubr.f32.mxu0 0.0
    %740 = vmatmul.mubr.f32.gmra.mxu0 %v660
    %v741 = vpop.f32.mrf.mxu0
    %v742 = vadd.f32 0.0, %v741
    %v743 = vpop.f32.mrf.mxu0
    %744 = vmatprep.mubr.f32.mxu0 0.0
    %745 = vmatmul.mubr.f32.gmra.mxu0 %v663
    %v746 = vpop.f32.mrf.mxu0
    %v747 = vadd.f32 0.0, %v746
    %v748 = vpop.f32.mrf.mxu0
    %749 = vdwg.mxu0
    %v751 = vsel %vm76, %v515, 0
    %v754 = vsel %vm76, %v520, 0
    %v757 = vsel %vm76, %v525, 0
    %v760 = vsel %vm76, %v530, 0
    %762 = vmatprep.subr.mxu0 0.0
    %763 = vmatpush1.msra.mxu0 0.0
    %764 = vmatprep.subr.mxu0 0.0
    %765 = vmatpush1.msra.mxu0 0.0
    %766 = vmatprep.subr.mxu0 0.0
    %767 = vmatpush1.msra.mxu0 0.0
    %768 = vmatprep.subr.mxu0 0.0
    %769 = vmatpush1.msra.mxu0 0.0
    %770 = vmatprep.subr.mxu0 0.0
    %771 = vmatpush1.msra.mxu0 0.0
    %772 = vmatprep.subr.mxu0 0.0
    %773 = vmatpush1.msra.mxu0 0.0
    %774 = vmatprep.subr.mxu0 0.0
    %775 = vmatpush1.msra.mxu0 0.0
    %776 = vmatprep.subr.mxu0 0.0
    %777 = vmatpush1.msra.mxu0 0.0
    %778 = vmatprep.subr.mxu0 0.0
    %779 = vmatpush1.msra.mxu0 0.0
    %780 = vmatprep.subr.mxu0 0.0
    %781 = vmatpush1.msra.mxu0 0.0
    %782 = vmatprep.subr.mxu0 0.0
    %783 = vmatpush1.msra.mxu0 0.0
    %784 = vmatprep.subr.mxu0 0.0
    %785 = vmatpush1.msra.mxu0 0.0
    %786 = vmatprep.subr.mxu0 0.0
    %787 = vmatpush1.msra.mxu0 0.0
    %788 = vmatprep.subr.mxu0 0.0
    %789 = vmatpush1.msra.mxu0 0.0
    %790 = vmatprep.subr.mxu0 0.0
    %791 = vmatpush1.msra.mxu0 %v434
    %792 = vmatprep.subr.mxu0 0.0
    %793 = vmatpush1.msra.mxu0 %v433
    %794 = vmatprep.subr.mxu0 0.0
    %795 = vmatpush2.msra.mxu0 0.0
    %796 = vmatprep.subr.mxu0 0.0
    %797 = vmatpush2.msra.mxu0 0.0
    %798 = vmatprep.subr.mxu0 0.0
    %799 = vmatpush2.msra.mxu0 0.0
    %800 = vmatprep.subr.mxu0 0.0
    %801 = vmatpush2.msra.mxu0 0.0
    %802 = vmatprep.subr.mxu0 0.0
    %803 = vmatpush2.msra.mxu0 0.0
    %804 = vmatprep.subr.mxu0 0.0
    %805 = vmatpush2.msra.mxu0 0.0
    %806 = vmatprep.subr.mxu0 0.0
    %807 = vmatpush2.msra.mxu0 0.0
    %808 = vmatprep.subr.mxu0 0.0
    %809 = vmatpush2.msra.mxu0 0.0
    %810 = vmatprep.subr.mxu0 0.0
    %811 = vmatpush2.msra.mxu0 0.0
    %812 = vmatprep.subr.mxu0 0.0
    %813 = vmatpush2.msra.mxu0 0.0
    %814 = vmatprep.subr.mxu0 0.0
    %815 = vmatpush2.msra.mxu0 0.0
    %816 = vmatprep.subr.mxu0 0.0
    %817 = vmatpush2.msra.mxu0 0.0
    %818 = vmatprep.subr.mxu0 0.0
    %819 = vmatpush2.msra.mxu0 0.0
    %820 = vmatprep.subr.mxu0 0.0
    %821 = vmatpush2.msra.mxu0 0.0
    %822 = vmatprep.subr.mxu0 0.0
    %823 = vmatpush2.msra.mxu0 0.0
    %824 = vmatprep.subr.mxu0 0.0
    %825 = vmatpush2.msra.mxu0 0.0
    %826 = vmatprep.mubr.f32.mxu0 0.0
    %827 = vmatmul.mubr.f32.gmra.mxu0 %v751
    %v828 = vpop.f32.mrf.mxu0
    %v829 = vadd.f32 %v732, %v828
    %v830 = vpop.f32.mrf.mxu0
    %831 = vmatprep.mubr.f32.mxu0 0.0
    %832 = vmatmul.mubr.f32.gmra.mxu0 %v754
    %v833 = vpop.f32.mrf.mxu0
    %v834 = vadd.f32 %v737, %v833
    %v835 = vpop.f32.mrf.mxu0
    %836 = vmatprep.mubr.f32.mxu0 0.0
    %837 = vmatmul.mubr.f32.gmra.mxu0 %v757
    %v838 = vpop.f32.mrf.mxu0
    %v839 = vadd.f32 %v742, %v838
    %v840 = vpop.f32.mrf.mxu0
    %841 = vmatprep.mubr.f32.mxu0 0.0
    %842 = vmatmul.mubr.f32.gmra.mxu0 %v760
    %v843 = vpop.f32.mrf.mxu0
    %v844 = vadd.f32 %v747, %v843
    %v845 = vpop.f32.mrf.mxu0
    %846 = vdwg.mxu0
    %v847 = vld [vmem:[%s4] sm:$0xff]
    %v848 = vld [vmem:[%s4 + $0x8] sm:$0xff]
    %v849 = vld [vmem:[%s4 + $0x10] sm:$0xff]
    %v850 = vld [vmem:[%s4 + $0x18] sm:$0xff]
    %v851 = vld [vmem:[%s5] sm:$0x1]
    %v853 = vlaneseq
    %v854 = vshrl.u32 %v853, 7
    %v855 = vsub.s32 0, %v854
    %v856 = vrot.slane %v851, %v855
    %vm858 = vcmask 261120
    %v860 = vsel %vm858, %v829, 0
    %v863 = vsel %vm858, %v834, 0
    %v866 = vsel %vm858, %v839, 0
    %v869 = vsel %vm858, %v844, 0
    %871 = vmatprep.subr.mxu0 0.0
    %872 = vmatpush1.msra.mxu0 0.0
    %873 = vmatprep.subr.mxu0 0.0
    %874 = vmatpush1.msra.mxu0 0.0
    %875 = vmatprep.subr.mxu0 0.0
    %876 = vmatpush1.msra.mxu0 0.0
    %877 = vmatprep.subr.mxu0 0.0
    %878 = vmatpush1.msra.mxu0 0.0
    %879 = vmatprep.subr.mxu0 0.0
    %880 = vmatpush1.msra.mxu0 0.0
    %881 = vmatprep.subr.mxu0 0.0
    %882 = vmatpush1.msra.mxu0 0.0
    %883 = vmatprep.subr.mxu0 0.0
    %884 = vmatpush1.msra.mxu0 0.0
    %885 = vmatprep.subr.mxu0 0.0
    %886 = vmatpush1.msra.mxu0 0.0
    %887 = vmatprep.subr.mxu0 0.0
    %888 = vmatpush1.msra.mxu0 0.0
    %889 = vmatprep.subr.mxu0 0.0
    %890 = vmatpush1.msra.mxu0 0.0
    %891 = vmatprep.subr.mxu0 0.0
    %892 = vmatpush1.msra.mxu0 0.0
    %893 = vmatprep.subr.mxu0 0.0
    %894 = vmatpush1.msra.mxu0 0.0
    %895 = vmatprep.subr.mxu0 0.0
    %896 = vmatpush1.msra.mxu0 %v850
    %897 = vmatprep.subr.mxu0 0.0
    %898 = vmatpush1.msra.mxu0 %v849
    %899 = vmatprep.subr.mxu0 0.0
    %900 = vmatpush1.msra.mxu0 %v848
    %901 = vmatprep.subr.mxu0 0.0
    %902 = vmatpush1.msra.mxu0 %v847
    %903 = vmatprep.subr.mxu0 0.0
    %904 = vmatpush2.msra.mxu0 0.0
    %905 = vmatprep.subr.mxu0 0.0
    %906 = vmatpush2.msra.mxu0 0.0
    %907 = vmatprep.subr.mxu0 0.0
    %908 = vmatpush2.msra.mxu0 0.0
    %909 = vmatprep.subr.mxu0 0.0
    %910 = vmatpush2.msra.mxu0 0.0
    %911 = vmatprep.subr.mxu0 0.0
    %912 = vmatpush2.msra.mxu0 0.0
    %913 = vmatprep.subr.mxu0 0.0
    %914 = vmatpush2.msra.mxu0 0.0
    %915 = vmatprep.subr.mxu0 0.0
    %916 = vmatpush2.msra.mxu0 0.0
    %917 = vmatprep.subr.mxu0 0.0
    %918 = vmatpush2.msra.mxu0 0.0
    %919 = vmatprep.subr.mxu0 0.0
    %920 = vmatpush2.msra.mxu0 0.0
    %921 = vmatprep.subr.mxu0 0.0
    %922 = vmatpush2.msra.mxu0 0.0
    %923 = vmatprep.subr.mxu0 0.0
    %924 = vmatpush2.msra.mxu0 0.0
    %925 = vmatprep.subr.mxu0 0.0
    %926 = vmatpush2.msra.mxu0 0.0
    %927 = vmatprep.subr.mxu0 0.0
    %928 = vmatpush2.msra.mxu0 0.0
    %929 = vmatprep.subr.mxu0 0.0
    %930 = vmatpush2.msra.mxu0 0.0
    %931 = vmatprep.subr.mxu0 0.0
    %932 = vmatpush2.msra.mxu0 0.0
    %933 = vmatprep.subr.mxu0 0.0
    %934 = vmatpush2.msra.mxu0 0.0
    %935 = vmatprep.mubr.f32.mxu0 0.0
    %936 = vmatmul.mubr.f32.gmra.mxu0 %v860
    %v937 = vpop.f32.mrf.mxu0
    %v938 = vadd.f32 %v856, %v937
    %v939 = vpop.f32.mrf.mxu0
    %940 = vmatprep.mubr.f32.mxu0 0.0
    %941 = vmatmul.mubr.f32.gmra.mxu0 %v863
    %v942 = vpop.f32.mrf.mxu0
    %v943 = vadd.f32 %v856, %v942
    %v944 = vpop.f32.mrf.mxu0
    %945 = vmatprep.mubr.f32.mxu0 0.0
    %946 = vmatmul.mubr.f32.gmra.mxu0 %v866
    %v947 = vpop.f32.mrf.mxu0
    %v948 = vadd.f32 %v856, %v947
    %v949 = vpop.f32.mrf.mxu0
    %950 = vmatprep.mubr.f32.mxu0 0.0
    %951 = vmatmul.mubr.f32.gmra.mxu0 %v869
    %v952 = vpop.f32.mrf.mxu0
    %v953 = vadd.f32 %v856, %v952
    %v954 = vpop.f32.mrf.mxu0
    %955 = vdwg.mxu0
    %956 = vmax.xlane.f32.xlu0 %v938
    %v957 = vpop.xlane.xlu0 %956
    %958 = vmax.xlane.f32.xlu0 %v943
    %v959 = vpop.xlane.xlu0 %958
    %960 = vmax.xlane.f32.xlu0 %v948
    %v961 = vpop.xlane.xlu0 %960
    %962 = vmax.xlane.f32.xlu0 %v953
    %v963 = vpop.xlane.xlu0 %962
    %v964 = vsub.f32 %v938, %v957
    %v965 = vsub.f32 %v943, %v959
    %v966 = vsub.f32 %v948, %v961
    %v967 = vsub.f32 %v953, %v963
    %v968 = vmul.f32 %v964, 1.442695
    %v969 = vpow.pop %v968
    %v970 = vmul.f32 %v965, 1.442695
    %v971 = vpow.pop %v970
    %v972 = vmul.f32 %v966, 1.442695
    %v973 = vpow.pop %v972
    %v974 = vmul.f32 %v967, 1.442695
    %v975 = vpow.pop %v974
    %976 = vadd.xlane.f32.xlu0 %v969
    %v977 = vpop.xlane.xlu0 %976
    %978 = vadd.xlane.f32.xlu0 %v971
    %v979 = vpop.xlane.xlu0 %978
    %980 = vadd.xlane.f32.xlu0 %v973
    %v981 = vpop.xlane.xlu0 %980
    %982 = vadd.xlane.f32.xlu0 %v975
    %v983 = vpop.xlane.xlu0 %982
    %v984 = vrcp.pop %v977
    %v985 = vmul.f32 %v969, %v984
    %v986 = vrcp.pop %v979
    %v987 = vmul.f32 %v971, %v986
    %v988 = vrcp.pop %v981
    %v989 = vmul.f32 %v973, %v988
    %v990 = vrcp.pop %v983
    %v991 = vmul.f32 %v975, %v990
    %v992 = vadd.f32 %v985, 1e-20
    %v993 = vadd.f32 %v987, 1e-20
    %v994 = vadd.f32 %v989, 1e-20
    %v995 = vadd.f32 %v991, 1e-20
    %v996 = vlog2.pop %v992
    %v997 = vmul.f32 %v996, 0.6931472
    %v998 = vlog2.pop %v993
    %v999 = vmul.f32 %v998, 0.6931472
    %v1000 = vlog2.pop %v994
    %v1001 = vmul.f32 %v1000, 0.6931472
    %v1002 = vlog2.pop %v995
    %v1003 = vmul.f32 %v1002, 0.6931472
    %v1004 = vsub.f32 %v997, -4.8520303
    %v1005 = vsub.f32 %v999, -4.8520303
    %v1006 = vsub.f32 %v1001, -4.8520303
    %v1007 = vsub.f32 %v1003, -4.8520303
    %v1008 = vmul.f32 %v985, %v1004
    %v1009 = vmul.f32 %v987, %v1005
    %v1010 = vmul.f32 %v989, %v1006
    %v1011 = vmul.f32 %v991, %v1007
    %1012 = vadd.xlane.f32.xlu0 %v1008
    %v1013 = vpop.xlane.xlu0 %1012
    %1014 = vadd.xlane.f32.xlu0 %v1009
    %v1015 = vpop.xlane.xlu0 %1014
    %1016 = vadd.xlane.f32.xlu0 %v1010
    %v1017 = vpop.xlane.xlu0 %1016
    %1018 = vadd.xlane.f32.xlu0 %v1011
    %v1019 = vpop.xlane.xlu0 %1018
    %v1020 = vadd.f32 %v1013, %v1015
    %v1021 = vadd.f32 %v1020, %v1017
    %v1022 = vadd.f32 %v1021, %v1019
    %v1023 = vrot.slane %v1022, 4
    %v1024 = vadd.f32 %v1022, %v1023
    %v1025 = vrot.slane %v1024, 2
    %v1026 = vadd.f32 %v1024, %v1025
    %v1027 = vrot.slane %v1026, 1
    %v1028 = vadd.f32 %v1026, %v1027
    %v1029 = vmul.f32 %v1028, 0.03125
    %vm1030 = vcmask 0
    %1031 = vst.msk [vmem:[#allocation4] sm:$0x1] %vm1030, %v1029
    %v1032 = vld [vmem:[%s1] sm:$0xff]
    %v1033 = vld [vmem:[%s1 + $0x8] sm:$0xff]
    %v1034 = vld [vmem:[%s1 + $0x10] sm:$0xff]
    %v1035 = vld [vmem:[%s1 + $0x18] sm:$0xff]
    %v1036 = vadd.f32 %v938, %v1032
    %v1037 = vadd.f32 %v943, %v1033
    %v1038 = vadd.f32 %v948, %v1034
    %v1039 = vadd.f32 %v953, %v1035
    %1040 = vmax.xlane.f32.xlu0 %v1036
    %v1041 = vpop.xlane.xlu0 %1040
    %1042 = vmax.xlane.f32.xlu0 %v1037
    %v1043 = vpop.xlane.xlu0 %1042
    %1044 = vmax.xlane.f32.xlu0 %v1038
    %v1045 = vpop.xlane.xlu0 %1044
    %1046 = vmax.xlane.f32.xlu0 %v1039
    %v1047 = vpop.xlane.xlu0 %1046
    %v1048 = vcvt.s32.f32 %v43
    %vm1049 = vcmp.ge.f32.partialorder %v1036, %v1041
    %vm1050 = vcmp.ge.f32.partialorder %v1037, %v1043
    %vm1051 = vcmp.ge.f32.partialorder %v1038, %v1045
    %vm1052 = vcmp.ge.f32.partialorder %v1039, %v1047
    %v1053 = vsel %vm1049, %v1048, 128.0
    %v1054 = vsel %vm1050, %v1048, 128.0
    %v1055 = vsel %vm1051, %v1048, 128.0
    %v1056 = vsel %vm1052, %v1048, 128.0
    %1057 = vmin.xlane.f32.xlu0 %v1053
    %v1058 = vpop.xlane.xlu0 %1057
    %1059 = vmin.xlane.f32.xlu0 %v1054
    %v1060 = vpop.xlane.xlu0 %1059
    %1061 = vmin.xlane.f32.xlu0 %v1055
    %v1062 = vpop.xlane.xlu0 %1061
    %1063 = vmin.xlane.f32.xlu0 %v1056
    %v1064 = vpop.xlane.xlu0 %1063
    %vm1065 = vcmp.eq.f32.partialorder %v1048, %v1058
    %vm1066 = vcmp.eq.f32.partialorder %v1048, %v1060
    %vm1067 = vcmp.eq.f32.partialorder %v1048, %v1062
    %vm1068 = vcmp.eq.f32.partialorder %v1048, %v1064
    %v1069 = vsel %vm1065, 1, 0
    %v1070 = vsel %vm1066, 1, 0
    %v1071 = vsel %vm1067, 1, 0
    %v1072 = vsel %vm1068, 1, 0
    %v1073 = vcvt.s32.f32 %v1069
    %v1074 = vcvt.s32.f32 %v1070
    %v1075 = vcvt.s32.f32 %v1071
    %v1076 = vcvt.s32.f32 %v1072
    %v1077 = vld [vmem:[%s6] sm:$0xff]
    %v1078 = vld [vmem:[%s6 + $0x8] sm:$0xff]
    %v1079 = vld [vmem:[%s6 + $0x10] sm:$0xff]
    %v1080 = vld [vmem:[%s6 + $0x18] sm:$0xff]
    %v1081 = vld [vmem:[%s6 + $0x20] sm:$0xff]
    %v1082 = vld [vmem:[%s6 + $0x28] sm:$0xff]
    %v1083 = vld [vmem:[%s6 + $0x30] sm:$0xff]
    %v1084 = vld [vmem:[%s6 + $0x38] sm:$0xff]
    %v1085 = vld [vmem:[%s6 + $0x40] sm:$0xff]
    %v1086 = vld [vmem:[%s6 + $0x48] sm:$0xff]
    %v1087 = vld [vmem:[%s6 + $0x50] sm:$0xff]
    %v1088 = vld [vmem:[%s6 + $0x58] sm:$0xff]
    %v1089 = vld [vmem:[%s6 + $0x60] sm:$0xff]
    %v1090 = vld [vmem:[%s6 + $0x68] sm:$0xff]
    %v1091 = vld [vmem:[%s6 + $0x70] sm:$0xff]
    %v1092 = vld [vmem:[%s6 + $0x78] sm:$0xff]
    %v1093 = vld [vmem:[%s7] sm:$0x1]
    %v1095 = vlaneseq
    %v1096 = vshrl.u32 %v1095, 7
    %v1097 = vsub.s32 0, %v1096
    %v1098 = vrot.slane %v1093, %v1097
    %1100 = vmatprep.subr.mxu0 0.0
    %1101 = vmatpush1.msra.mxu0 %v1092
    %1102 = vmatprep.subr.mxu0 0.0
    %1103 = vmatpush1.msra.mxu0 %v1091
    %1104 = vmatprep.subr.mxu0 0.0
    %1105 = vmatpush1.msra.mxu0 %v1090
    %1106 = vmatprep.subr.mxu0 0.0
    %1107 = vmatpush1.msra.mxu0 %v1089
    %1108 = vmatprep.subr.mxu0 0.0
    %1109 = vmatpush1.msra.mxu0 %v1088
    %1110 = vmatprep.subr.mxu0 0.0
    %1111 = vmatpush1.msra.mxu0 %v1087
    %1112 = vmatprep.subr.mxu0 0.0
    %1113 = vmatpush1.msra.mxu0 %v1086
    %1114 = vmatprep.subr.mxu0 0.0
    %1115 = vmatpush1.msra.mxu0 %v1085
    %1116 = vmatprep.subr.mxu0 0.0
    %1117 = vmatpush1.msra.mxu0 %v1084
    %1118 = vmatprep.subr.mxu0 0.0
    %1119 = vmatpush1.msra.mxu0 %v1083
    %1120 = vmatprep.subr.mxu0 0.0
    %1121 = vmatpush1.msra.mxu0 %v1082
    %1122 = vmatprep.subr.mxu0 0.0
    %1123 = vmatpush1.msra.mxu0 %v1081
    %1124 = vmatprep.subr.mxu0 0.0
    %1125 = vmatpush1.msra.mxu0 %v1080
    %1126 = vmatprep.subr.mxu0 0.0
    %1127 = vmatpush1.msra.mxu0 %v1079
    %1128 = vmatprep.subr.mxu0 0.0
    %1129 = vmatpush1.msra.mxu0 %v1078
    %1130 = vmatprep.subr.mxu0 0.0
    %1131 = vmatpush1.msra.mxu0 %v1077
    %1132 = vmatprep.subr.mxu0 0.0
    %1133 = vmatpush2.msra.mxu0 0.0
    %1134 = vmatprep.subr.mxu0 0.0
    %1135 = vmatpush2.msra.mxu0 0.0
    %1136 = vmatprep.subr.mxu0 0.0
    %1137 = vmatpush2.msra.mxu0 0.0
    %1138 = vmatprep.subr.mxu0 0.0
    %1139 = vmatpush2.msra.mxu0 0.0
    %1140 = vmatprep.subr.mxu0 0.0
    %1141 = vmatpush2.msra.mxu0 0.0
    %1142 = vmatprep.subr.mxu0 0.0
    %1143 = vmatpush2.msra.mxu0 0.0
    %1144 = vmatprep.subr.mxu0 0.0
    %1145 = vmatpush2.msra.mxu0 0.0
    %1146 = vmatprep.subr.mxu0 0.0
    %1147 = vmatpush2.msra.mxu0 0.0
    %1148 = vmatprep.subr.mxu0 0.0
    %1149 = vmatpush2.msra.mxu0 0.0
    %1150 = vmatprep.subr.mxu0 0.0
    %1151 = vmatpush2.msra.mxu0 0.0
    %1152 = vmatprep.subr.mxu0 0.0
    %1153 = vmatpush2.msra.mxu0 0.0
    %1154 = vmatprep.subr.mxu0 0.0
    %1155 = vmatpush2.msra.mxu0 0.0
    %1156 = vmatprep.subr.mxu0 0.0
    %1157 = vmatpush2.msra.mxu0 0.0
    %1158 = vmatprep.subr.mxu0 0.0
    %1159 = vmatpush2.msra.mxu0 0.0
    %1160 = vmatprep.subr.mxu0 0.0
    %1161 = vmatpush2.msra.mxu0 0.0
    %1162 = vmatprep.subr.mxu0 0.0
    %1163 = vmatpush2.msra.mxu0 0.0
    %1164 = vmatprep.mubr.f32.mxu0 0.0
    %1165 = vmatmul.mubr.f32.gmra.mxu0 %v1073
    %v1166 = vpop.f32.mrf.mxu0
    %v1167 = vadd.f32 %v1098, %v1166
    %v1168 = vpop.f32.mrf.mxu0
    %1169 = vmatprep.mubr.f32.mxu0 0.0
    %1170 = vmatmul.mubr.f32.gmra.mxu0 %v1074
    %v1171 = vpop.f32.mrf.mxu0
    %v1172 = vadd.f32 %v1098, %v1171
    %v1173 = vpop.f32.mrf.mxu0
    %1174 = vmatprep.mubr.f32.mxu0 0.0
    %1175 = vmatmul.mubr.f32.gmra.mxu0 %v1075
    %v1176 = vpop.f32.mrf.mxu0
    %v1177 = vadd.f32 %v1098, %v1176
    %v1178 = vpop.f32.mrf.mxu0
    %1179 = vmatprep.mubr.f32.mxu0 0.0
    %1180 = vmatmul.mubr.f32.gmra.mxu0 %v1076
    %v1181 = vpop.f32.mrf.mxu0
    %v1182 = vadd.f32 %v1098, %v1181
    %v1183 = vpop.f32.mrf.mxu0
    %1184 = vdwg.mxu0
    %v1185 = vadd.s32 %v40, 32
    %v1186 = vadd.s32 %v40, 40
    %v1187 = vadd.s32 %v40, 48
    %v1188 = vadd.s32 %v40, 56
    %v1189 = vmul.u32 %v43, 2
    %vm1190 = vcmp.eq.s32.totalorder %v40, %v1189
    %vm1191 = vcmp.eq.s32.totalorder %v41, %v1189
    %vm1192 = vcmp.eq.s32.totalorder %v411, %v1189
    %vm1193 = vcmp.eq.s32.totalorder %v412, %v1189
    %vm1194 = vcmp.eq.s32.totalorder %v1185, %v1189
    %vm1195 = vcmp.eq.s32.totalorder %v1186, %v1189
    %vm1196 = vcmp.eq.s32.totalorder %v1187, %v1189
    %vm1197 = vcmp.eq.s32.totalorder %v1188, %v1189
    %v1198 = vsel %vm1190, 1, 0
    %v1199 = vsel %vm1191, 1, 0
    %v1200 = vsel %vm1192, 1, 0
    %v1201 = vsel %vm1193, 1, 0
    %v1202 = vsel %vm1194, 1, 0
    %v1203 = vsel %vm1195, 1, 0
    %v1204 = vsel %vm1196, 1, 0
    %v1205 = vsel %vm1197, 1, 0
    %v1206 = vcvt.s32.f32 %v1198
    %v1207 = vcvt.s32.f32 %v1199
    %v1208 = vcvt.s32.f32 %v1200
    %v1209 = vcvt.s32.f32 %v1201
    %v1210 = vcvt.s32.f32 %v1202
    %v1211 = vcvt.s32.f32 %v1203
    %v1212 = vcvt.s32.f32 %v1204
    %v1213 = vcvt.s32.f32 %v1205
    %vm1214 = vcmp.eq.s32.totalorder %v40, %v43
    %vm1215 = vcmp.eq.s32.totalorder %v41, %v43
    %vm1216 = vcmp.eq.s32.totalorder %v411, %v43
    %vm1217 = vcmp.eq.s32.totalorder %v412, %v43
    %v1218 = vsel %vm1214, 1, 0
    %v1219 = vsel %vm1215, 1, 0
    %v1220 = vsel %vm1216, 1, 0
    %v1221 = vsel %vm1217, 1, 0
    %v1222 = vcvt.s32.f32 %v1218
    %v1223 = vcvt.s32.f32 %v1219
    %v1224 = vcvt.s32.f32 %v1220
    %v1225 = vcvt.s32.f32 %v1221
    %v1227 = vsel %vm858, %v1206, 0
    %v1230 = vsel %vm858, %v1207, 0
    %v1233 = vsel %vm858, %v1208, 0
    %v1236 = vsel %vm858, %v1209, 0
    %v1239 = vsel %vm858, %v1210, 0
    %v1242 = vsel %vm858, %v1211, 0
    %v1245 = vsel %vm858, %v1212, 0
    %v1248 = vsel %vm858, %v1213, 0
    %1250 = vmatprep.subr.mxu0 0.0
    %1251 = vmatpush1.msra.mxu0 0.0
    %1252 = vmatprep.subr.mxu0 0.0
    %1253 = vmatpush1.msra.mxu0 0.0
    %1254 = vmatprep.subr.mxu0 0.0
    %1255 = vmatpush1.msra.mxu0 0.0
    %1256 = vmatprep.subr.mxu0 0.0
    %1257 = vmatpush1.msra.mxu0 0.0
    %1258 = vmatprep.subr.mxu0 0.0
    %1259 = vmatpush1.msra.mxu0 0.0
    %1260 = vmatprep.subr.mxu0 0.0
    %1261 = vmatpush1.msra.mxu0 0.0
    %1262 = vmatprep.subr.mxu0 0.0
    %1263 = vmatpush1.msra.mxu0 0.0
    %1264 = vmatprep.subr.mxu0 0.0
    %1265 = vmatpush1.msra.mxu0 0.0
    %1266 = vmatprep.subr.mxu0 0.0
    %1267 = vmatpush1.msra.mxu0 0.0
    %1268 = vmatprep.subr.mxu0 0.0
    %1269 = vmatpush1.msra.mxu0 0.0
    %1270 = vmatprep.subr.mxu0 0.0
    %1271 = vmatpush1.msra.mxu0 0.0
    %1272 = vmatprep.subr.mxu0 0.0
    %1273 = vmatpush1.msra.mxu0 0.0
    %1274 = vmatprep.subr.mxu0 0.0
    %1275 = vmatpush1.msra.mxu0 %v1182
    %1276 = vmatprep.subr.mxu0 0.0
    %1277 = vmatpush1.msra.mxu0 %v1177
    %1278 = vmatprep.subr.mxu0 0.0
    %1279 = vmatpush1.msra.mxu0 %v1172
    %1280 = vmatprep.subr.mxu0 0.0
    %1281 = vmatpush1.msra.mxu0 %v1167
    %1282 = vmatprep.subr.mxu0 0.0
    %1283 = vmatpush2.msra.mxu0 0.0
    %1284 = vmatprep.subr.mxu0 0.0
    %1285 = vmatpush2.msra.mxu0 0.0
    %1286 = vmatprep.subr.mxu0 0.0
    %1287 = vmatpush2.msra.mxu0 0.0
    %1288 = vmatprep.subr.mxu0 0.0
    %1289 = vmatpush2.msra.mxu0 0.0
    %1290 = vmatprep.subr.mxu0 0.0
    %1291 = vmatpush2.msra.mxu0 0.0
    %1292 = vmatprep.subr.mxu0 0.0
    %1293 = vmatpush2.msra.mxu0 0.0
    %1294 = vmatprep.subr.mxu0 0.0
    %1295 = vmatpush2.msra.mxu0 0.0
    %1296 = vmatprep.subr.mxu0 0.0
    %1297 = vmatpush2.msra.mxu0 0.0
    %1298 = vmatprep.subr.mxu0 0.0
    %1299 = vmatpush2.msra.mxu0 0.0
    %1300 = vmatprep.subr.mxu0 0.0
    %1301 = vmatpush2.msra.mxu0 0.0
    %1302 = vmatprep.subr.mxu0 0.0
    %1303 = vmatpush2.msra.mxu0 0.0
    %1304 = vmatprep.subr.mxu0 0.0
    %1305 = vmatpush2.msra.mxu0 0.0
    %1306 = vmatprep.subr.mxu0 0.0
    %1307 = vmatpush2.msra.mxu0 0.0
    %1308 = vmatprep.subr.mxu0 0.0
    %1309 = vmatpush2.msra.mxu0 0.0
    %1310 = vmatprep.subr.mxu0 0.0
    %1311 = vmatpush2.msra.mxu0 0.0
    %1312 = vmatprep.subr.mxu0 0.0
    %1313 = vmatpush2.msra.mxu0 0.0
    %1314 = vmatprep.mubr.f32.mxu0 0.0
    %1315 = vmatmul.mubr.f32.gmra.mxu0 %v1227
    %v1316 = vpop.f32.mrf.mxu0
    %v1317 = vadd.f32 0.0, %v1316
    %v1318 = vpop.f32.mrf.mxu0
    %1319 = vmatprep.mubr.f32.mxu0 0.0
    %1320 = vmatmul.mubr.f32.gmra.mxu0 %v1230
    %v1321 = vpop.f32.mrf.mxu0
    %v1322 = vadd.f32 0.0, %v1321
    %v1323 = vpop.f32.mrf.mxu0
    %1324 = vmatprep.mubr.f32.mxu0 0.0
    %1325 = vmatmul.mubr.f32.gmra.mxu0 %v1233
    %v1326 = vpop.f32.mrf.mxu0
    %v1327 = vadd.f32 0.0, %v1326
    %v1328 = vpop.f32.mrf.mxu0
    %1329 = vmatprep.mubr.f32.mxu0 0.0
    %1330 = vmatmul.mubr.f32.gmra.mxu0 %v1236
    %v1331 = vpop.f32.mrf.mxu0
    %v1332 = vadd.f32 0.0, %v1331
    %v1333 = vpop.f32.mrf.mxu0
    %1334 = vmatprep.mubr.f32.mxu0 0.0
    %1335 = vmatmul.mubr.f32.gmra.mxu0 %v1239
    %v1336 = vpop.f32.mrf.mxu0
    %v1337 = vadd.f32 0.0, %v1336
    %v1338 = vpop.f32.mrf.mxu0
    %1339 = vmatprep.mubr.f32.mxu0 0.0
    %1340 = vmatmul.mubr.f32.gmra.mxu0 %v1242
    %v1341 = vpop.f32.mrf.mxu0
    %v1342 = vadd.f32 0.0, %v1341
    %v1343 = vpop.f32.mrf.mxu0
    %1344 = vmatprep.mubr.f32.mxu0 0.0
    %1345 = vmatmul.mubr.f32.gmra.mxu0 %v1245
    %v1346 = vpop.f32.mrf.mxu0
    %v1347 = vadd.f32 0.0, %v1346
    %v1348 = vpop.f32.mrf.mxu0
    %1349 = vmatprep.mubr.f32.mxu0 0.0
    %1350 = vmatmul.mubr.f32.gmra.mxu0 %v1248
    %v1351 = vpop.f32.mrf.mxu0
    %v1352 = vadd.f32 0.0, %v1351
    %v1353 = vpop.f32.mrf.mxu0
    %1354 = vdwg.mxu0
    %v1355 = vadd.s32 %v1189, 1
    %vm1356 = vcmp.eq.s32.totalorder %v40, %v1355
    %vm1357 = vcmp.eq.s32.totalorder %v41, %v1355
    %vm1358 = vcmp.eq.s32.totalorder %v411, %v1355
    %vm1359 = vcmp.eq.s32.totalorder %v412, %v1355
    %vm1360 = vcmp.eq.s32.totalorder %v1185, %v1355
    %vm1361 = vcmp.eq.s32.totalorder %v1186, %v1355
    %vm1362 = vcmp.eq.s32.totalorder %v1187, %v1355
    %vm1363 = vcmp.eq.s32.totalorder %v1188, %v1355
    %v1364 = vsel %vm1356, 1, 0
    %v1365 = vsel %vm1357, 1, 0
    %v1366 = vsel %vm1358, 1, 0
    %v1367 = vsel %vm1359, 1, 0
    %v1368 = vsel %vm1360, 1, 0
    %v1369 = vsel %vm1361, 1, 0
    %v1370 = vsel %vm1362, 1, 0
    %v1371 = vsel %vm1363, 1, 0
    %v1372 = vcvt.s32.f32 %v1364
    %v1373 = vcvt.s32.f32 %v1365
    %v1374 = vcvt.s32.f32 %v1366
    %v1375 = vcvt.s32.f32 %v1367
    %v1376 = vcvt.s32.f32 %v1368
    %v1377 = vcvt.s32.f32 %v1369
    %v1378 = vcvt.s32.f32 %v1370
    %v1379 = vcvt.s32.f32 %v1371
    %v1380 = vadd.s32 %v43, 16
    %vm1381 = vcmp.eq.s32.totalorder %v40, %v1380
    %vm1382 = vcmp.eq.s32.totalorder %v41, %v1380
    %vm1383 = vcmp.eq.s32.totalorder %v411, %v1380
    %vm1384 = vcmp.eq.s32.totalorder %v412, %v1380
    %v1385 = vsel %vm1381, 1, 0
    %v1386 = vsel %vm1382, 1, 0
    %v1387 = vsel %vm1383, 1, 0
    %v1388 = vsel %vm1384, 1, 0
    %v1389 = vcvt.s32.f32 %v1385
    %v1390 = vcvt.s32.f32 %v1386
    %v1391 = vcvt.s32.f32 %v1387
    %v1392 = vcvt.s32.f32 %v1388
    %v1394 = vsel %vm858, %v1372, 0
    %v1397 = vsel %vm858, %v1373, 0
    %v1400 = vsel %vm858, %v1374, 0
    %v1403 = vsel %vm858, %v1375, 0
    %v1406 = vsel %vm858, %v1376, 0
    %v1409 = vsel %vm858, %v1377, 0
    %v1412 = vsel %vm858, %v1378, 0
    %v1415 = vsel %vm858, %v1379, 0
    %1417 = vmatprep.subr.mxu0 0.0
    %1418 = vmatpush1.msra.mxu0 0.0
    %1419 = vmatprep.subr.mxu0 0.0
    %1420 = vmatpush1.msra.mxu0 0.0
    %1421 = vmatprep.subr.mxu0 0.0
    %1422 = vmatpush1.msra.mxu0 0.0
    %1423 = vmatprep.subr.mxu0 0.0
    %1424 = vmatpush1.msra.mxu0 0.0
    %1425 = vmatprep.subr.mxu0 0.0
    %1426 = vmatpush1.msra.mxu0 0.0
    %1427 = vmatprep.subr.mxu0 0.0
    %1428 = vmatpush1.msra.mxu0 0.0
    %1429 = vmatprep.subr.mxu0 0.0
    %1430 = vmatpush1.msra.mxu0 0.0
    %1431 = vmatprep.subr.mxu0 0.0
    %1432 = vmatpush1.msra.mxu0 0.0
    %1433 = vmatprep.subr.mxu0 0.0
    %1434 = vmatpush1.msra.mxu0 0.0
    %1435 = vmatprep.subr.mxu0 0.0
    %1436 = vmatpush1.msra.mxu0 0.0
    %1437 = vmatprep.subr.mxu0 0.0
    %1438 = vmatpush1.msra.mxu0 0.0
    %1439 = vmatprep.subr.mxu0 0.0
    %1440 = vmatpush1.msra.mxu0 0.0
    %1441 = vmatprep.subr.mxu0 0.0
    %1442 = vmatpush1.msra.mxu0 %v1182
    %1443 = vmatprep.subr.mxu0 0.0
    %1444 = vmatpush1.msra.mxu0 %v1177
    %1445 = vmatprep.subr.mxu0 0.0
    %1446 = vmatpush1.msra.mxu0 %v1172
    %1447 = vmatprep.subr.mxu0 0.0
    %1448 = vmatpush1.msra.mxu0 %v1167
    %1449 = vmatprep.subr.mxu0 0.0
    %1450 = vmatpush2.msra.mxu0 0.0
    %1451 = vmatprep.subr.mxu0 0.0
    %1452 = vmatpush2.msra.mxu0 0.0
    %1453 = vmatprep.subr.mxu0 0.0
    %1454 = vmatpush2.msra.mxu0 0.0
    %1455 = vmatprep.subr.mxu0 0.0
    %1456 = vmatpush2.msra.mxu0 0.0
    %1457 = vmatprep.subr.mxu0 0.0
    %1458 = vmatpush2.msra.mxu0 0.0
    %1459 = vmatprep.subr.mxu0 0.0
    %1460 = vmatpush2.msra.mxu0 0.0
    %1461 = vmatprep.subr.mxu0 0.0
    %1462 = vmatpush2.msra.mxu0 0.0
    %1463 = vmatprep.subr.mxu0 0.0
    %1464 = vmatpush2.msra.mxu0 0.0
    %1465 = vmatprep.subr.mxu0 0.0
    %1466 = vmatpush2.msra.mxu0 0.0
    %1467 = vmatprep.subr.mxu0 0.0
    %1468 = vmatpush2.msra.mxu0 0.0
    %1469 = vmatprep.subr.mxu0 0.0
    %1470 = vmatpush2.msra.mxu0 0.0
    %1471 = vmatprep.subr.mxu0 0.0
    %1472 = vmatpush2.msra.mxu0 0.0
    %1473 = vmatprep.subr.mxu0 0.0
    %1474 = vmatpush2.msra.mxu0 0.0
    %1475 = vmatprep.subr.mxu0 0.0
    %1476 = vmatpush2.msra.mxu0 0.0
    %1477 = vmatprep.subr.mxu0 0.0
    %1478 = vmatpush2.msra.mxu0 0.0
    %1479 = vmatprep.subr.mxu0 0.0
    %1480 = vmatpush2.msra.mxu0 0.0
    %1481 = vmatprep.mubr.f32.mxu0 0.0
    %1482 = vmatmul.mubr.f32.gmra.mxu0 %v1394
    %v1483 = vpop.f32.mrf.mxu0
    %v1484 = vadd.f32 0.0, %v1483
    %v1485 = vpop.f32.mrf.mxu0
    %1486 = vmatprep.mubr.f32.mxu0 0.0
    %1487 = vmatmul.mubr.f32.gmra.mxu0 %v1397
    %v1488 = vpop.f32.mrf.mxu0
    %v1489 = vadd.f32 0.0, %v1488
    %v1490 = vpop.f32.mrf.mxu0
    %1491 = vmatprep.mubr.f32.mxu0 0.0
    %1492 = vmatmul.mubr.f32.gmra.mxu0 %v1400
    %v1493 = vpop.f32.mrf.mxu0
    %v1494 = vadd.f32 0.0, %v1493
    %v1495 = vpop.f32.mrf.mxu0
    %1496 = vmatprep.mubr.f32.mxu0 0.0
    %1497 = vmatmul.mubr.f32.gmra.mxu0 %v1403
    %v1498 = vpop.f32.mrf.mxu0
    %v1499 = vadd.f32 0.0, %v1498
    %v1500 = vpop.f32.mrf.mxu0
    %1501 = vmatprep.mubr.f32.mxu0 0.0
    %1502 = vmatmul.mubr.f32.gmra.mxu0 %v1406
    %v1503 = vpop.f32.mrf.mxu0
    %v1504 = vadd.f32 0.0, %v1503
    %v1505 = vpop.f32.mrf.mxu0
    %1506 = vmatprep.mubr.f32.mxu0 0.0
    %1507 = vmatmul.mubr.f32.gmra.mxu0 %v1409
    %v1508 = vpop.f32.mrf.mxu0
    %v1509 = vadd.f32 0.0, %v1508
    %v1510 = vpop.f32.mrf.mxu0
    %1511 = vmatprep.mubr.f32.mxu0 0.0
    %1512 = vmatmul.mubr.f32.gmra.mxu0 %v1412
    %v1513 = vpop.f32.mrf.mxu0
    %v1514 = vadd.f32 0.0, %v1513
    %v1515 = vpop.f32.mrf.mxu0
    %1516 = vmatprep.mubr.f32.mxu0 0.0
    %1517 = vmatmul.mubr.f32.gmra.mxu0 %v1415
    %v1518 = vpop.f32.mrf.mxu0
    %v1519 = vadd.f32 0.0, %v1518
    %v1520 = vpop.f32.mrf.mxu0
    %1521 = vdwg.mxu0
    %v1523 = vsel %vm858, %v1484, 0
    %v1526 = vsel %vm858, %v1489, 0
    %v1529 = vsel %vm858, %v1494, 0
    %v1532 = vsel %vm858, %v1499, 0
    %v1535 = vsel %vm858, %v1504, 0
    %v1538 = vsel %vm858, %v1509, 0
    %v1541 = vsel %vm858, %v1514, 0
    %v1544 = vsel %vm858, %v1519, 0
    %1546 = vmatprep.subr.mxu0 0.0
    %1547 = vmatpush1.msra.mxu0 0.0
    %1548 = vmatprep.subr.mxu0 0.0
    %1549 = vmatpush1.msra.mxu0 0.0
    %1550 = vmatprep.subr.mxu0 0.0
    %1551 = vmatpush1.msra.mxu0 0.0
    %1552 = vmatprep.subr.mxu0 0.0
    %1553 = vmatpush1.msra.mxu0 0.0
    %1554 = vmatprep.subr.mxu0 0.0
    %1555 = vmatpush1.msra.mxu0 0.0
    %1556 = vmatprep.subr.mxu0 0.0
    %1557 = vmatpush1.msra.mxu0 0.0
    %1558 = vmatprep.subr.mxu0 0.0
    %1559 = vmatpush1.msra.mxu0 0.0
    %1560 = vmatprep.subr.mxu0 0.0
    %1561 = vmatpush1.msra.mxu0 0.0
    %1562 = vmatprep.subr.mxu0 0.0
    %1563 = vmatpush1.msra.mxu0 0.0
    %1564 = vmatprep.subr.mxu0 0.0
    %1565 = vmatpush1.msra.mxu0 0.0
    %1566 = vmatprep.subr.mxu0 0.0
    %1567 = vmatpush1.msra.mxu0 0.0
    %1568 = vmatprep.subr.mxu0 0.0
    %1569 = vmatpush1.msra.mxu0 0.0
    %1570 = vmatprep.subr.mxu0 0.0
    %1571 = vmatpush1.msra.mxu0 %v1392
    %1572 = vmatprep.subr.mxu0 0.0
    %1573 = vmatpush1.msra.mxu0 %v1391
    %1574 = vmatprep.subr.mxu0 0.0
    %1575 = vmatpush1.msra.mxu0 %v1390
    %1576 = vmatprep.subr.mxu0 0.0
    %1577 = vmatpush1.msra.mxu0 %v1389
    %1578 = vmatprep.subr.mxu0 0.0
    %1579 = vmatpush2.msra.mxu0 0.0
    %1580 = vmatprep.subr.mxu0 0.0
    %1581 = vmatpush2.msra.mxu0 0.0
    %1582 = vmatprep.subr.mxu0 0.0
    %1583 = vmatpush2.msra.mxu0 0.0
    %1584 = vmatprep.subr.mxu0 0.0
    %1585 = vmatpush2.msra.mxu0 0.0
    %1586 = vmatprep.subr.mxu0 0.0
    %1587 = vmatpush2.msra.mxu0 0.0
    %1588 = vmatprep.subr.mxu0 0.0
    %1589 = vmatpush2.msra.mxu0 0.0
    %1590 = vmatprep.subr.mxu0 0.0
    %1591 = vmatpush2.msra.mxu0 0.0
    %1592 = vmatprep.subr.mxu0 0.0
    %1593 = vmatpush2.msra.mxu0 0.0
    %1594 = vmatprep.subr.mxu0 0.0
    %1595 = vmatpush2.msra.mxu0 0.0
    %1596 = vmatprep.subr.mxu0 0.0
    %1597 = vmatpush2.msra.mxu0 0.0
    %1598 = vmatprep.subr.mxu0 0.0
    %1599 = vmatpush2.msra.mxu0 0.0
    %1600 = vmatprep.subr.mxu0 0.0
    %1601 = vmatpush2.msra.mxu0 0.0
    %1602 = vmatprep.subr.mxu0 0.0
    %1603 = vmatpush2.msra.mxu0 0.0
    %1604 = vmatprep.subr.mxu0 0.0
    %1605 = vmatpush2.msra.mxu0 0.0
    %1606 = vmatprep.subr.mxu0 0.0
    %1607 = vmatpush2.msra.mxu0 0.0
    %1608 = vmatprep.subr.mxu0 0.0
    %1609 = vmatpush2.msra.mxu0 0.0
    %1610 = vmatprep.mubr.f32.mxu0 0.0
    %1611 = vmatmul.mubr.f32.gmra.mxu0 %v1523
    %v1612 = vpop.f32.mrf.mxu0
    %v1613 = vadd.f32 0.0, %v1612
    %v1614 = vpop.f32.mrf.mxu0
    %1615 = vmatprep.mubr.f32.mxu0 0.0
    %1616 = vmatmul.mubr.f32.gmra.mxu0 %v1526
    %v1617 = vpop.f32.mrf.mxu0
    %v1618 = vadd.f32 0.0, %v1617
    %v1619 = vpop.f32.mrf.mxu0
    %1620 = vmatprep.mubr.f32.mxu0 0.0
    %1621 = vmatmul.mubr.f32.gmra.mxu0 %v1529
    %v1622 = vpop.f32.mrf.mxu0
    %v1623 = vadd.f32 0.0, %v1622
    %v1624 = vpop.f32.mrf.mxu0
    %1625 = vmatprep.mubr.f32.mxu0 0.0
    %1626 = vmatmul.mubr.f32.gmra.mxu0 %v1532
    %v1627 = vpop.f32.mrf.mxu0
    %v1628 = vadd.f32 0.0, %v1627
    %v1629 = vpop.f32.mrf.mxu0
    %1630 = vmatprep.mubr.f32.mxu0 0.0
    %1631 = vmatmul.mubr.f32.gmra.mxu0 %v1535
    %v1632 = vpop.f32.mrf.mxu0
    %v1633 = vadd.f32 0.0, %v1632
    %v1634 = vpop.f32.mrf.mxu0
    %1635 = vmatprep.mubr.f32.mxu0 0.0
    %1636 = vmatmul.mubr.f32.gmra.mxu0 %v1538
    %v1637 = vpop.f32.mrf.mxu0
    %v1638 = vadd.f32 0.0, %v1637
    %v1639 = vpop.f32.mrf.mxu0
    %1640 = vmatprep.mubr.f32.mxu0 0.0
    %1641 = vmatmul.mubr.f32.gmra.mxu0 %v1541
    %v1642 = vpop.f32.mrf.mxu0
    %v1643 = vadd.f32 0.0, %v1642
    %v1644 = vpop.f32.mrf.mxu0
    %1645 = vmatprep.mubr.f32.mxu0 0.0
    %1646 = vmatmul.mubr.f32.gmra.mxu0 %v1544
    %v1647 = vpop.f32.mrf.mxu0
    %v1648 = vadd.f32 0.0, %v1647
    %v1649 = vpop.f32.mrf.mxu0
    %1650 = vdwg.mxu0
    %v1652 = vsel %vm858, %v1317, 0
    %v1655 = vsel %vm858, %v1322, 0
    %v1658 = vsel %vm858, %v1327, 0
    %v1661 = vsel %vm858, %v1332, 0
    %v1664 = vsel %vm858, %v1337, 0
    %v1667 = vsel %vm858, %v1342, 0
    %v1670 = vsel %vm858, %v1347, 0
    %v1673 = vsel %vm858, %v1352, 0
    %1675 = vmatprep.subr.mxu0 0.0
    %1676 = vmatpush1.msra.mxu0 0.0
    %1677 = vmatprep.subr.mxu0 0.0
    %1678 = vmatpush1.msra.mxu0 0.0
    %1679 = vmatprep.subr.mxu0 0.0
    %1680 = vmatpush1.msra.mxu0 0.0
    %1681 = vmatprep.subr.mxu0 0.0
    %1682 = vmatpush1.msra.mxu0 0.0
    %1683 = vmatprep.subr.mxu0 0.0
    %1684 = vmatpush1.msra.mxu0 0.0
    %1685 = vmatprep.subr.mxu0 0.0
    %1686 = vmatpush1.msra.mxu0 0.0
    %1687 = vmatprep.subr.mxu0 0.0
    %1688 = vmatpush1.msra.mxu0 0.0
    %1689 = vmatprep.subr.mxu0 0.0
    %1690 = vmatpush1.msra.mxu0 0.0
    %1691 = vmatprep.subr.mxu0 0.0
    %1692 = vmatpush1.msra.mxu0 0.0
    %1693 = vmatprep.subr.mxu0 0.0
    %1694 = vmatpush1.msra.mxu0 0.0
    %1695 = vmatprep.subr.mxu0 0.0
    %1696 = vmatpush1.msra.mxu0 0.0
    %1697 = vmatprep.subr.mxu0 0.0
    %1698 = vmatpush1.msra.mxu0 0.0
    %1699 = vmatprep.subr.mxu0 0.0
    %1700 = vmatpush1.msra.mxu0 %v1225
    %1701 = vmatprep.subr.mxu0 0.0
    %1702 = vmatpush1.msra.mxu0 %v1224
    %1703 = vmatprep.subr.mxu0 0.0
    %1704 = vmatpush1.msra.mxu0 %v1223
    %1705 = vmatprep.subr.mxu0 0.0
    %1706 = vmatpush1.msra.mxu0 %v1222
    %1707 = vmatprep.subr.mxu0 0.0
    %1708 = vmatpush2.msra.mxu0 0.0
    %1709 = vmatprep.subr.mxu0 0.0
    %1710 = vmatpush2.msra.mxu0 0.0
    %1711 = vmatprep.subr.mxu0 0.0
    %1712 = vmatpush2.msra.mxu0 0.0
    %1713 = vmatprep.subr.mxu0 0.0
    %1714 = vmatpush2.msra.mxu0 0.0
    %1715 = vmatprep.subr.mxu0 0.0
    %1716 = vmatpush2.msra.mxu0 0.0
    %1717 = vmatprep.subr.mxu0 0.0
    %1718 = vmatpush2.msra.mxu0 0.0
    %1719 = vmatprep.subr.mxu0 0.0
    %1720 = vmatpush2.msra.mxu0 0.0
    %1721 = vmatprep.subr.mxu0 0.0
    %1722 = vmatpush2.msra.mxu0 0.0
    %1723 = vmatprep.subr.mxu0 0.0
    %1724 = vmatpush2.msra.mxu0 0.0
    %1725 = vmatprep.subr.mxu0 0.0
    %1726 = vmatpush2.msra.mxu0 0.0
    %1727 = vmatprep.subr.mxu0 0.0
    %1728 = vmatpush2.msra.mxu0 0.0
    %1729 = vmatprep.subr.mxu0 0.0
    %1730 = vmatpush2.msra.mxu0 0.0
    %1731 = vmatprep.subr.mxu0 0.0
    %1732 = vmatpush2.msra.mxu0 0.0
    %1733 = vmatprep.subr.mxu0 0.0
    %1734 = vmatpush2.msra.mxu0 0.0
    %1735 = vmatprep.subr.mxu0 0.0
    %1736 = vmatpush2.msra.mxu0 0.0
    %1737 = vmatprep.subr.mxu0 0.0
    %1738 = vmatpush2.msra.mxu0 0.0
    %1739 = vmatprep.mubr.f32.mxu0 0.0
    %1740 = vmatmul.mubr.f32.gmra.mxu0 %v1652
    %v1741 = vpop.f32.mrf.mxu0
    %v1742 = vadd.f32 %v1613, %v1741
    %v1743 = vpop.f32.mrf.mxu0
    %1744 = vmatprep.mubr.f32.mxu0 0.0
    %1745 = vmatmul.mubr.f32.gmra.mxu0 %v1655
    %v1746 = vpop.f32.mrf.mxu0
    %v1747 = vadd.f32 %v1618, %v1746
    %v1748 = vpop.f32.mrf.mxu0
    %1749 = vmatprep.mubr.f32.mxu0 0.0
    %1750 = vmatmul.mubr.f32.gmra.mxu0 %v1658
    %v1751 = vpop.f32.mrf.mxu0
    %v1752 = vadd.f32 %v1623, %v1751
    %v1753 = vpop.f32.mrf.mxu0
    %1754 = vmatprep.mubr.f32.mxu0 0.0
    %1755 = vmatmul.mubr.f32.gmra.mxu0 %v1661
    %v1756 = vpop.f32.mrf.mxu0
    %v1757 = vadd.f32 %v1628, %v1756
    %v1758 = vpop.f32.mrf.mxu0
    %1759 = vmatprep.mubr.f32.mxu0 0.0
    %1760 = vmatmul.mubr.f32.gmra.mxu0 %v1664
    %v1761 = vpop.f32.mrf.mxu0
    %v1762 = vadd.f32 %v1633, %v1761
    %v1763 = vpop.f32.mrf.mxu0
    %1764 = vmatprep.mubr.f32.mxu0 0.0
    %1765 = vmatmul.mubr.f32.gmra.mxu0 %v1667
    %v1766 = vpop.f32.mrf.mxu0
    %v1767 = vadd.f32 %v1638, %v1766
    %v1768 = vpop.f32.mrf.mxu0
    %1769 = vmatprep.mubr.f32.mxu0 0.0
    %1770 = vmatmul.mubr.f32.gmra.mxu0 %v1670
    %v1771 = vpop.f32.mrf.mxu0
    %v1772 = vadd.f32 %v1643, %v1771
    %v1773 = vpop.f32.mrf.mxu0
    %1774 = vmatprep.mubr.f32.mxu0 0.0
    %1775 = vmatmul.mubr.f32.gmra.mxu0 %v1673
    %v1776 = vpop.f32.mrf.mxu0
    %v1777 = vadd.f32 %v1648, %v1776
    %v1778 = vpop.f32.mrf.mxu0
    %1779 = vdwg.mxu0
    %v1780 = vld [vmem:[%s8] sm:$0xff]
    %v1781 = vld [vmem:[%s8 + $0x8] sm:$0xff]
    %v1782 = vld [vmem:[%s8 + $0x10] sm:$0xff]
    %v1783 = vld [vmem:[%s8 + $0x18] sm:$0xff]
    %v1784 = vld [vmem:[%s9] sm:$0xff]
    %v1785 = vld [vmem:[%s9 + $0x8] sm:$0xff]
    %v1787 = vsel %vm76, %v1742, 0
    %v1790 = vsel %vm76, %v1747, 0
    %v1793 = vsel %vm76, %v1752, 0
    %v1796 = vsel %vm76, %v1757, 0
    %v1799 = vsel %vm76, %v1762, 0
    %v1802 = vsel %vm76, %v1767, 0
    %v1805 = vsel %vm76, %v1772, 0
    %v1808 = vsel %vm76, %v1777, 0
    %1810 = vmatprep.subr.mxu0 0.0
    %1811 = vmatpush1.msra.mxu0 0.0
    %1812 = vmatprep.subr.mxu0 0.0
    %1813 = vmatpush1.msra.mxu0 0.0
    %1814 = vmatprep.subr.mxu0 0.0
    %1815 = vmatpush1.msra.mxu0 0.0
    %1816 = vmatprep.subr.mxu0 0.0
    %1817 = vmatpush1.msra.mxu0 0.0
    %1818 = vmatprep.subr.mxu0 0.0
    %1819 = vmatpush1.msra.mxu0 0.0
    %1820 = vmatprep.subr.mxu0 0.0
    %1821 = vmatpush1.msra.mxu0 0.0
    %1822 = vmatprep.subr.mxu0 0.0
    %1823 = vmatpush1.msra.mxu0 0.0
    %1824 = vmatprep.subr.mxu0 0.0
    %1825 = vmatpush1.msra.mxu0 0.0
    %1826 = vmatprep.subr.mxu0 0.0
    %1827 = vmatpush1.msra.mxu0 0.0
    %1828 = vmatprep.subr.mxu0 0.0
    %1829 = vmatpush1.msra.mxu0 0.0
    %1830 = vmatprep.subr.mxu0 0.0
    %1831 = vmatpush1.msra.mxu0 0.0
    %1832 = vmatprep.subr.mxu0 0.0
    %1833 = vmatpush1.msra.mxu0 0.0
    %1834 = vmatprep.subr.mxu0 0.0
    %1835 = vmatpush1.msra.mxu0 0.0
    %1836 = vmatprep.subr.mxu0 0.0
    %1837 = vmatpush1.msra.mxu0 0.0
    %1838 = vmatprep.subr.mxu0 0.0
    %1839 = vmatpush1.msra.mxu0 %v50
    %1840 = vmatprep.subr.mxu0 0.0
    %1841 = vmatpush1.msra.mxu0 %v49
    %1842 = vmatprep.subr.mxu0 0.0
    %1843 = vmatpush2.msra.mxu0 0.0
    %1844 = vmatprep.subr.mxu0 0.0
    %1845 = vmatpush2.msra.mxu0 0.0
    %1846 = vmatprep.subr.mxu0 0.0
    %1847 = vmatpush2.msra.mxu0 0.0
    %1848 = vmatprep.subr.mxu0 0.0
    %1849 = vmatpush2.msra.mxu0 0.0
    %1850 = vmatprep.subr.mxu0 0.0
    %1851 = vmatpush2.msra.mxu0 0.0
    %1852 = vmatprep.subr.mxu0 0.0
    %1853 = vmatpush2.msra.mxu0 0.0
    %1854 = vmatprep.subr.mxu0 0.0
    %1855 = vmatpush2.msra.mxu0 0.0
    %1856 = vmatprep.subr.mxu0 0.0
    %1857 = vmatpush2.msra.mxu0 0.0
    %1858 = vmatprep.subr.mxu0 0.0
    %1859 = vmatpush2.msra.mxu0 0.0
    %1860 = vmatprep.subr.mxu0 0.0
    %1861 = vmatpush2.msra.mxu0 0.0
    %1862 = vmatprep.subr.mxu0 0.0
    %1863 = vmatpush2.msra.mxu0 0.0
    %1864 = vmatprep.subr.mxu0 0.0
    %1865 = vmatpush2.msra.mxu0 0.0
    %1866 = vmatprep.subr.mxu0 0.0
    %1867 = vmatpush2.msra.mxu0 0.0
    %1868 = vmatprep.subr.mxu0 0.0
    %1869 = vmatpush2.msra.mxu0 0.0
    %1870 = vmatprep.subr.mxu0 0.0
    %1871 = vmatpush2.msra.mxu0 0.0
    %1872 = vmatprep.subr.mxu0 0.0
    %1873 = vmatpush2.msra.mxu0 0.0
    %1874 = vmatprep.mubr.f32.mxu0 0.0
    %1875 = vmatmul.mubr.f32.gmra.mxu0 %v1787
    %v1876 = vpop.f32.mrf.mxu0
    %v1877 = vadd.f32 0.0, %v1876
    %v1878 = vpop.f32.mrf.mxu0
    %1879 = vmatprep.mubr.f32.mxu0 0.0
    %1880 = vmatmul.mubr.f32.gmra.mxu0 %v1790
    %v1881 = vpop.f32.mrf.mxu0
    %v1882 = vadd.f32 0.0, %v1881
    %v1883 = vpop.f32.mrf.mxu0
    %1884 = vmatprep.mubr.f32.mxu0 0.0
    %1885 = vmatmul.mubr.f32.gmra.mxu0 %v1793
    %v1886 = vpop.f32.mrf.mxu0
    %v1887 = vadd.f32 0.0, %v1886
    %v1888 = vpop.f32.mrf.mxu0
    %1889 = vmatprep.mubr.f32.mxu0 0.0
    %1890 = vmatmul.mubr.f32.gmra.mxu0 %v1796
    %v1891 = vpop.f32.mrf.mxu0
    %v1892 = vadd.f32 0.0, %v1891
    %v1893 = vpop.f32.mrf.mxu0
    %1894 = vmatprep.mubr.f32.mxu0 0.0
    %1895 = vmatmul.mubr.f32.gmra.mxu0 %v1799
    %v1896 = vpop.f32.mrf.mxu0
    %v1897 = vadd.f32 0.0, %v1896
    %v1898 = vpop.f32.mrf.mxu0
    %1899 = vmatprep.mubr.f32.mxu0 0.0
    %1900 = vmatmul.mubr.f32.gmra.mxu0 %v1802
    %v1901 = vpop.f32.mrf.mxu0
    %v1902 = vadd.f32 0.0, %v1901
    %v1903 = vpop.f32.mrf.mxu0
    %1904 = vmatprep.mubr.f32.mxu0 0.0
    %1905 = vmatmul.mubr.f32.gmra.mxu0 %v1805
    %v1906 = vpop.f32.mrf.mxu0
    %v1907 = vadd.f32 0.0, %v1906
    %v1908 = vpop.f32.mrf.mxu0
    %1909 = vmatprep.mubr.f32.mxu0 0.0
    %1910 = vmatmul.mubr.f32.gmra.mxu0 %v1808
    %v1911 = vpop.f32.mrf.mxu0
    %v1912 = vadd.f32 0.0, %v1911
    %v1913 = vpop.f32.mrf.mxu0
    %1914 = vdwg.mxu0
    %1915 = vmatprep.subr.mxu0 0.0
    %1916 = vmatpush1.msra.mxu0 0.0
    %1917 = vmatprep.subr.mxu0 0.0
    %1918 = vmatpush1.msra.mxu0 0.0
    %1919 = vmatprep.subr.mxu0 0.0
    %1920 = vmatpush1.msra.mxu0 0.0
    %1921 = vmatprep.subr.mxu0 0.0
    %1922 = vmatpush1.msra.mxu0 0.0
    %1923 = vmatprep.subr.mxu0 0.0
    %1924 = vmatpush1.msra.mxu0 0.0
    %1925 = vmatprep.subr.mxu0 0.0
    %1926 = vmatpush1.msra.mxu0 0.0
    %1927 = vmatprep.subr.mxu0 0.0
    %1928 = vmatpush1.msra.mxu0 0.0
    %1929 = vmatprep.subr.mxu0 0.0
    %1930 = vmatpush1.msra.mxu0 0.0
    %1931 = vmatprep.subr.mxu0 0.0
    %1932 = vmatpush1.msra.mxu0 0.0
    %1933 = vmatprep.subr.mxu0 0.0
    %1934 = vmatpush1.msra.mxu0 0.0
    %1935 = vmatprep.subr.mxu0 0.0
    %1936 = vmatpush1.msra.mxu0 0.0
    %1937 = vmatprep.subr.mxu0 0.0
    %1938 = vmatpush1.msra.mxu0 0.0
    %1939 = vmatprep.subr.mxu0 0.0
    %1940 = vmatpush1.msra.mxu0 0.0
    %1941 = vmatprep.subr.mxu0 0.0
    %1942 = vmatpush1.msra.mxu0 0.0
    %1943 = vmatprep.subr.mxu0 0.0
    %1944 = vmatpush1.msra.mxu0 %v57
    %1945 = vmatprep.subr.mxu0 0.0
    %1946 = vmatpush1.msra.mxu0 %v56
    %1947 = vmatprep.subr.mxu0 0.0
    %1948 = vmatpush2.msra.mxu0 0.0
    %1949 = vmatprep.subr.mxu0 0.0
    %1950 = vmatpush2.msra.mxu0 0.0
    %1951 = vmatprep.subr.mxu0 0.0
    %1952 = vmatpush2.msra.mxu0 0.0
    %1953 = vmatprep.subr.mxu0 0.0
    %1954 = vmatpush2.msra.mxu0 0.0
    %1955 = vmatprep.subr.mxu0 0.0
    %1956 = vmatpush2.msra.mxu0 0.0
    %1957 = vmatprep.subr.mxu0 0.0
    %1958 = vmatpush2.msra.mxu0 0.0
    %1959 = vmatprep.subr.mxu0 0.0
    %1960 = vmatpush2.msra.mxu0 0.0
    %1961 = vmatprep.subr.mxu0 0.0
    %1962 = vmatpush2.msra.mxu0 0.0
    %1963 = vmatprep.subr.mxu0 0.0
    %1964 = vmatpush2.msra.mxu0 0.0
    %1965 = vmatprep.subr.mxu0 0.0
    %1966 = vmatpush2.msra.mxu0 0.0
    %1967 = vmatprep.subr.mxu0 0.0
    %1968 = vmatpush2.msra.mxu0 0.0
    %1969 = vmatprep.subr.mxu0 0.0
    %1970 = vmatpush2.msra.mxu0 0.0
    %1971 = vmatprep.subr.mxu0 0.0
    %1972 = vmatpush2.msra.mxu0 0.0
    %1973 = vmatprep.subr.mxu0 0.0
    %1974 = vmatpush2.msra.mxu0 0.0
    %1975 = vmatprep.subr.mxu0 0.0
    %1976 = vmatpush2.msra.mxu0 0.0
    %1977 = vmatprep.subr.mxu0 0.0
    %1978 = vmatpush2.msra.mxu0 0.0
    %1979 = vmatprep.mubr.f32.mxu0 0.0
    %1980 = vmatmul.mubr.f32.gmra.mxu0 %v1787
    %v1981 = vpop.f32.mrf.mxu0
    %v1982 = vadd.f32 0.0, %v1981
    %v1983 = vpop.f32.mrf.mxu0
    %1984 = vmatprep.mubr.f32.mxu0 0.0
    %1985 = vmatmul.mubr.f32.gmra.mxu0 %v1790
    %v1986 = vpop.f32.mrf.mxu0
    %v1987 = vadd.f32 0.0, %v1986
    %v1988 = vpop.f32.mrf.mxu0
    %1989 = vmatprep.mubr.f32.mxu0 0.0
    %1990 = vmatmul.mubr.f32.gmra.mxu0 %v1793
    %v1991 = vpop.f32.mrf.mxu0
    %v1992 = vadd.f32 0.0, %v1991
    %v1993 = vpop.f32.mrf.mxu0
    %1994 = vmatprep.mubr.f32.mxu0 0.0
    %1995 = vmatmul.mubr.f32.gmra.mxu0 %v1796
    %v1996 = vpop.f32.mrf.mxu0
    %v1997 = vadd.f32 0.0, %v1996
    %v1998 = vpop.f32.mrf.mxu0
    %1999 = vmatprep.mubr.f32.mxu0 0.0
    %2000 = vmatmul.mubr.f32.gmra.mxu0 %v1799
    %v2001 = vpop.f32.mrf.mxu0
    %v2002 = vadd.f32 0.0, %v2001
    %v2003 = vpop.f32.mrf.mxu0
    %2004 = vmatprep.mubr.f32.mxu0 0.0
    %2005 = vmatmul.mubr.f32.gmra.mxu0 %v1802
    %v2006 = vpop.f32.mrf.mxu0
    %v2007 = vadd.f32 0.0, %v2006
    %v2008 = vpop.f32.mrf.mxu0
    %2009 = vmatprep.mubr.f32.mxu0 0.0
    %2010 = vmatmul.mubr.f32.gmra.mxu0 %v1805
    %v2011 = vpop.f32.mrf.mxu0
    %v2012 = vadd.f32 0.0, %v2011
    %v2013 = vpop.f32.mrf.mxu0
    %2014 = vmatprep.mubr.f32.mxu0 0.0
    %2015 = vmatmul.mubr.f32.gmra.mxu0 %v1808
    %v2016 = vpop.f32.mrf.mxu0
    %v2017 = vadd.f32 0.0, %v2016
    %v2018 = vpop.f32.mrf.mxu0
    %2019 = vdwg.mxu0
    %2021 = vset.pattern.permute.xlu0 0
    %2022 = vperm.xlu0 %2021, %v1784
    %v2023 = vpop.permute.xlu0 %2022
    %2026 = vset.pattern.permute.xlu0 0
    %2027 = vperm.xlu0 %2026, %v1785
    %v2028 = vpop.permute.xlu0 %2027
    %v2031 = vsel %vm435, %v1781, 0
    %v2034 = vsel %vm435, %v1783, 0
    %2036 = vmatprep.subr.mxu0 0.0
    %2037 = vmatpush1.msra.mxu0 %v1777
    %2038 = vmatprep.subr.mxu0 0.0
    %2039 = vmatpush1.msra.mxu0 %v1772
    %2040 = vmatprep.subr.mxu0 0.0
    %2041 = vmatpush1.msra.mxu0 %v1767
    %2042 = vmatprep.subr.mxu0 0.0
    %2043 = vmatpush1.msra.mxu0 %v1762
    %2044 = vmatprep.subr.mxu0 0.0
    %2045 = vmatpush1.msra.mxu0 %v1757
    %2046 = vmatprep.subr.mxu0 0.0
    %2047 = vmatpush1.msra.mxu0 %v1752
    %2048 = vmatprep.subr.mxu0 0.0
    %2049 = vmatpush1.msra.mxu0 %v1747
    %2050 = vmatprep.subr.mxu0 0.0
    %2051 = vmatpush1.msra.mxu0 %v1742
    %2052 = vmatprep.subr.mxu0 0.0
    %2053 = vmatpush1.msra.mxu0 %v1912
    %2054 = vmatprep.subr.mxu0 0.0
    %2055 = vmatpush1.msra.mxu0 %v1907
    %2056 = vmatprep.subr.mxu0 0.0
    %2057 = vmatpush1.msra.mxu0 %v1902
    %2058 = vmatprep.subr.mxu0 0.0
    %2059 = vmatpush1.msra.mxu0 %v1897
    %2060 = vmatprep.subr.mxu0 0.0
    %2061 = vmatpush1.msra.mxu0 %v1892
    %2062 = vmatprep.subr.mxu0 0.0
    %2063 = vmatpush1.msra.mxu0 %v1887
    %2064 = vmatprep.subr.mxu0 0.0
    %2065 = vmatpush1.msra.mxu0 %v1882
    %2066 = vmatprep.subr.mxu0 0.0
    %2067 = vmatpush1.msra.mxu0 %v1877
    %2068 = vmatprep.subr.mxu0 0.0
    %2069 = vmatpush2.msra.mxu0 0.0
    %2070 = vmatprep.subr.mxu0 0.0
    %2071 = vmatpush2.msra.mxu0 0.0
    %2072 = vmatprep.subr.mxu0 0.0
    %2073 = vmatpush2.msra.mxu0 0.0
    %2074 = vmatprep.subr.mxu0 0.0
    %2075 = vmatpush2.msra.mxu0 0.0
    %2076 = vmatprep.subr.mxu0 0.0
    %2077 = vmatpush2.msra.mxu0 0.0
    %2078 = vmatprep.subr.mxu0 0.0
    %2079 = vmatpush2.msra.mxu0 0.0
    %2080 = vmatprep.subr.mxu0 0.0
    %2081 = vmatpush2.msra.mxu0 0.0
    %2082 = vmatprep.subr.mxu0 0.0
    %2083 = vmatpush2.msra.mxu0 0.0
    %2084 = vmatprep.subr.mxu0 0.0
    %2085 = vmatpush2.msra.mxu0 %v2017
    %2086 = vmatprep.subr.mxu0 0.0
    %2087 = vmatpush2.msra.mxu0 %v2012
    %2088 = vmatprep.subr.mxu0 0.0
    %2089 = vmatpush2.msra.mxu0 %v2007
    %2090 = vmatprep.subr.mxu0 0.0
    %2091 = vmatpush2.msra.mxu0 %v2002
    %2092 = vmatprep.subr.mxu0 0.0
    %2093 = vmatpush2.msra.mxu0 %v1997
    %2094 = vmatprep.subr.mxu0 0.0
    %2095 = vmatpush2.msra.mxu0 %v1992
    %2096 = vmatprep.subr.mxu0 0.0
    %2097 = vmatpush2.msra.mxu0 %v1987
    %2098 = vmatprep.subr.mxu0 0.0
    %2099 = vmatpush2.msra.mxu0 %v1982
    %2100 = vmatprep.mubr.f32.mxu0 %v2031
    %2101 = vmatmul.mubr.f32.gmra.mxu0 %v1780
    %v2102 = vpop.f32.mrf.mxu0
    %v2103 = vadd.f32 %v2023, %v2102
    %v2104 = vpop.f32.mrf.mxu0
    %2105 = vmatprep.mubr.f32.mxu0 %v2034
    %2106 = vmatmul.mubr.f32.gmra.mxu0 %v1782
    %v2107 = vpop.f32.mrf.mxu0
    %v2108 = vadd.f32 %v2028, %v2107
    %v2109 = vpop.f32.mrf.mxu0
    %2110 = vdwg.mxu0
    %2111 = vst.msk [vmem:[#allocation2] sm:$0xff] %vm76, %v2103
    %2112 = vst.msk [vmem:[#allocation2 + $0x8] sm:$0xff] %vm76, %v2108
    // Predicated region
    $region42: #{model_forward.1} parent=1 // pred_check
      _
    $region43: #{model_forward.1} parent=1 // pred_check_branch
      %2114 = sbr.rel (0) target = $region45
    $region44: #{model_forward.1} parent=1 // pred_region
      %s2116 = ssub.s32 256, 256
      %2117 = vsyncadd [#allocation3], %s2116
      %s2118 = sshll.u32 [#allocation2], 4
      %s2119 = int_to_ptr.vmem [resolvable:$true] %s2118
      %2124 = dma.vmem_to_hbm [thread:$0]  %s2119, 256, %s10, [#allocation3], 128, 128, 8
    $region45: #{model_forward.1} parent=1 // pred_fallthru
      _
    // Predicated region
    $region46: #{model_forward.1} parent=1 // pred_check
      _
    $region47: #{model_forward.1} parent=1 // pred_check_branch
      %2126 = sbr.rel (0) target = $region49
    $region48: #{model_forward.1} parent=1 // pred_region
      %s2128 = ssub.s32 16, 16
      %2129 = vsyncadd [#allocation5], %s2128
      %s2131 = sshll.u32 [#allocation4], 4
      %s2132 = int_to_ptr.vmem [resolvable:$true] %s2131
      %2134 = dma.vmem_to_hbm [thread:$0]  %s2132, 16, %s11, [#allocation5]
    $region49: #{model_forward.1} parent=1 // pred_fallthru
      _
    // Predicated region
    $region50: #{model_forward.1} parent=1 // pred_check
      _
    $region51: #{model_forward.1} parent=1 // pred_check_branch
      %2136 = sbr.rel (0) target = $region53
    $region52: #{model_forward.1} parent=1 // pred_region
      %2137 = dma.done [#allocation3], 256
    $region53: #{model_forward.1} parent=1 // pred_fallthru
      _
    // Predicated region
    $region54: #{model_forward.1} parent=1 // pred_check
      _
    $region55: #{model_forward.1} parent=1 // pred_check_branch
      %2139 = sbr.rel (0) target = $region57
    $region56: #{model_forward.1} parent=1 // pred_region
      %2140 = dma.done [#allocation5], 16
    $region57: #{model_forward.1} parent=1 // pred_fallthru
      _
    %2141 = vsyncpa [#allocation3], 1
    %2142 = vsyncpa [#allocation5], 1

</llo_original>
